<compile_context>
chip_gen: v7x
topology: tpu7x:2x2x1
jax: 0.10.0
libtpu: 0.0.40
codegen_flags: <defaults>
</compile_context>

<pallas_src>
import jax
import jax.numpy as jnp
from jax.experimental import pallas as pl
from jax.experimental.pallas import tpu as pltpu

# High-precision f32 matmuls everywhere (wrapper pre-pass + pure-JAX reference) so
# the tightened 1e-5 self-test tolerance is meaningful.
jax.config.update("jax_default_matmul_precision", "highest")

INPUT_SIZE = 4      # I
HIDDEN = 64         # H  (real GRU width)
OUT_FEATURES = 6    # O  (real fc width)

HP = 128            # hidden padded to one full lane tile
GP = 3 * HP         # three lane-aligned gate blocks [r | z | n]
OP = 128            # fc output padded to one full lane tile (lane-dense stores)


def _gru_fc_kernel(gi_ref, h0_ref, whh_ref, bhh_ref, wfc_ref, bfc_ref,
                   out_ref, hlast_ref):
    """Serial GRU recurrence fused with the output Linear, single invocation.

    gi_ref   : (T, B, GP) f32  precomputed x_t @ W_ih^T + b_ih, per-gate 128-lane padded
    h0_ref   : (B, HP)    f32  initial hidden state (cols >= HIDDEN are zero)
    whh_ref  : (HP, GP)   f32  hidden->hidden weights, transposed + per-gate padded
    bhh_ref  : (1, GP)    f32
    wfc_ref  : (HP, OP)   f32  fc weight, transposed + padded
    bfc_ref  : (1, OP)    f32
    out_ref  : (T, B, OP) f32  fc(h_t) per step; only [..., :OUT_FEATURES] is real
    hlast_ref: (B, HP)    f32  final hidden state
    """
    T = gi_ref.shape[0]

    def step(t, h_prev):
        gi = gi_ref[t]                                              # (B, GP)
        gh = jnp.dot(h_prev, whh_ref[...],
                     preferred_element_type=jnp.float32) + bhh_ref[...]
        # Lane-tile-aligned gate slices (boundaries at 0 / 128 / 256 -> free).
        i_r, i_z, i_n = gi[:, :HP], gi[:, HP:2 * HP], gi[:, 2 * HP:]
        h_r, h_z, h_n = gh[:, :HP], gh[:, HP:2 * HP], gh[:, 2 * HP:]
        r = jax.nn.sigmoid(i_r + h_r)
        z = jax.nn.sigmoid(i_z + h_z)
        n = jnp.tanh(i_n + r * h_n)
        h_new = (1.0 - z) * n + z * h_prev                          # pad cols stay 0
        # Fused fc with a 128-lane-dense store (VMEM; written back to HBM once).
        out_ref[t] = (jnp.dot(h_new, wfc_ref[...],
                              preferred_element_type=jnp.float32) + bfc_ref[...])
        return h_new

    h_last = jax.lax.fori_loop(0, T, step, h0_ref[...], unroll=T <= 16)
    hlast_ref[...] = h_last


def prepare_params(params):
    """One-time re-layout of torch-style GRU/Linear parameters for the kernel.

    Weights are transposed to (K, lanes) and each gate / the fc output is padded
    from 64 (or 6) to 128 lanes so in-kernel slices and stores are lane-aligned.
    Zero padding keeps the math exact.
    """
    H, I, O = HIDDEN, INPUT_SIZE, OUT_FEATURES
    w_ih, w_hh = params["w_ih"], params["w_hh"]     # (3H, I), (3H, H); gate order [r,z,n]
    b_ih, b_hh = params["b_ih"], params["b_hh"]     # (3H,)
    w_fc, b_fc = params["w_fc"], params["b_fc"]     # (O, H), (O,)

    w_ih_p = jnp.zeros((I, GP), jnp.float32)
    w_hh_p = jnp.zeros((HP, GP), jnp.float32)
    b_ih_p = jnp.zeros((GP,), jnp.float32)
    b_hh_p = jnp.zeros((1, GP), jnp.float32)
    for g in range(3):
        w_ih_p = w_ih_p.at[:, g * HP:g * HP + H].set(w_ih[g * H:(g + 1) * H, :].T)
        w_hh_p = w_hh_p.at[:H, g * HP:g * HP + H].set(w_hh[g * H:(g + 1) * H, :].T)
        b_ih_p = b_ih_p.at[g * HP:g * HP + H].set(b_ih[g * H:(g + 1) * H])
        b_hh_p = b_hh_p.at[0, g * HP:g * HP + H].set(b_hh[g * H:(g + 1) * H])
    w_fc_p = jnp.zeros((HP, OP), jnp.float32).at[:H, :O].set(w_fc.T)
    b_fc_p = jnp.zeros((1, OP), jnp.float32).at[0, :O].set(b_fc)
    return {"w_ih_p": w_ih_p, "w_hh_p": w_hh_p, "b_ih_p": b_ih_p,
            "b_hh_p": b_hh_p, "w_fc_p": w_fc_p, "b_fc_p": b_fc_p}


@jax.jit
def rnn_net_forward(x, prep, hidden=None):
    """JAX/Pallas equivalent of RNNNet.forward.

    x      : (B, T, INPUT_SIZE) float32, batch_first like the PyTorch module.
    prep   : output of prepare_params().
    hidden : optional (1, B, HIDDEN); None -> zeros.
    Returns (fc_out, hidden): fc_out is (B, 6) when T == 1 (mirrors out.squeeze(1)),
    else (B, T, 6); hidden is (1, B, HIDDEN).
    """
    B, T, _ = x.shape
    x = x.astype(jnp.float32)

    h0 = (jnp.zeros((B, HIDDEN), jnp.float32) if hidden is None
          else hidden[0].astype(jnp.float32))
    h0_p = jnp.pad(h0, ((0, 0), (0, HP - HIDDEN)))              # (B, HP)

    # Parallel pre-pass: input projection for ALL timesteps as one matmul, produced
    # directly in time-major (T, B, GP) layout so the serial loop only indexes gi[t].
    gi = jnp.einsum("bti,ig->tbg", x, prep["w_ih_p"],
                    precision=jax.lax.Precision.HIGHEST) + prep["b_ih_p"]

    out_p, h_last_p = pl.pallas_call(
        _gru_fc_kernel,
        out_shape=(
            jax.ShapeDtypeStruct((T, B, OP), jnp.float32),
            jax.ShapeDtypeStruct((B, HP), jnp.float32),
        ),
        # Single invocation (no grid): everything lives whole in VMEM; the serial
        # time loop runs inside the kernel, so there is no per-step grid overhead.
        in_specs=[pl.BlockSpec(memory_space=pltpu.MemorySpace.VMEM)
                  for _ in range(6)],
        out_specs=(
            pl.BlockSpec(memory_space=pltpu.MemorySpace.VMEM),
            pl.BlockSpec(memory_space=pltpu.MemorySpace.VMEM),
        ),
    )(gi, h0_p, prep["w_hh_p"], prep["b_hh_p"], prep["w_fc_p"], prep["b_fc_p"])

    fc_all = out_p[..., :OUT_FEATURES]                          # (T, B, 6)
    if T == 1:
        fc_out = fc_all[0]                                      # (B, 6) == out.squeeze(1)
    else:
        fc_out = jnp.transpose(fc_all, (1, 0, 2))               # (B, T, 6), tiny
    return fc_out, h_last_p[None, :, :HIDDEN]                   # hidden: (1, B, HIDDEN)


def init_params(key):
    """Deterministic init mirroring PyTorch defaults: U(-1/sqrt(H), 1/sqrt(H))."""
    H, I, O = HIDDEN, INPUT_SIZE, OUT_FEATURES
    k = 1.0 / jnp.sqrt(jnp.float32(H))
    keys = jax.random.split(key, 6)
    u = lambda kk, shape: jax.random.uniform(kk, shape, jnp.float32, -k, k)
    return {
        "w_ih": u(keys[0], (3 * H, I)),   # gate order [r, z, n] like torch
        "w_hh": u(keys[1], (3 * H, H)),
        "b_ih": u(keys[2], (3 * H,)),
        "b_hh": u(keys[3], (3 * H,)),
        "w_fc": u(keys[4], (O, H)),
        "b_fc": u(keys[5], (O,)),
    }


def _reference_forward(x, params, hidden=None):
    """Pure-JAX reference of the same GRU + Linear (for the correctness check)."""
    B, T, _ = x.shape
    H = HIDDEN
    h = jnp.zeros((B, H), jnp.float32) if hidden is None else hidden[0]
    w_ih, w_hh = params["w_ih"], params["w_hh"]
    b_ih, b_hh = params["b_ih"], params["b_hh"]
    outs = []
    for t in range(T):
        x_t = x[:, t, :]
        gi = x_t @ w_ih.T + b_ih
        gh = h @ w_hh.T + b_hh
        i_r, i_z, i_n = gi[:, :H], gi[:, H:2 * H], gi[:, 2 * H:]
        h_r, h_z, h_n = gh[:, :H], gh[:, H:2 * H], gh[:, 2 * H:]
        r = jax.nn.sigmoid(i_r + h_r)
        z = jax.nn.sigmoid(i_z + h_z)
        n = jnp.tanh(i_n + r * h_n)
        h = (1.0 - z) * n + z * h
        outs.append(h)
    out = jnp.stack(outs, axis=1)                               # (B, T, H)
    fc = out @ params["w_fc"].T + params["b_fc"]
    if T == 1:
        fc = fc[:, 0, :]
    return fc, h[None]


if __name__ == "__main__":
    key = jax.random.PRNGKey(0)
    pkey, xkey1, xkey2 = jax.random.split(key, 3)
    params = init_params(pkey)
    prep = prepare_params(params)

    B = 2
    TOL = 1e-5

    # Canonical module usage: seq_len == 1 (the forward squeezes dim 1).
    x1 = jax.random.normal(xkey1, (B, 1, INPUT_SIZE), jnp.float32)
    fc1, h1 = rnn_net_forward(x1, prep)
    jax.block_until_ready((fc1, h1))
    ref_fc1, ref_h1 = _reference_forward(x1, params)
    assert fc1.shape == (B, OUT_FEATURES)
    assert h1.shape == (1, B, HIDDEN)
    assert float(jnp.max(jnp.abs(fc1 - ref_fc1))) < TOL
    assert float(jnp.max(jnp.abs(h1 - ref_h1))) < TOL

    # Longer sequence + provided initial hidden exercises the in-kernel recurrence.
    T = 8
    x2 = jax.random.normal(xkey2, (B, T, INPUT_SIZE), jnp.float32)
    h_init = 0.1 * jax.random.normal(jax.random.PRNGKey(1), (1, B, HIDDEN), jnp.float32)
    fc2, h2 = rnn_net_forward(x2, prep, h_init)
    jax.block_until_ready((fc2, h2))
    ref_fc2, ref_h2 = _reference_forward(x2, params, h_init)
    assert fc2.shape == (B, T, OUT_FEATURES)
    assert h2.shape == (1, B, HIDDEN)
    assert float(jnp.max(jnp.abs(fc2 - ref_fc2))) < TOL
    assert float(jnp.max(jnp.abs(h2 - ref_h2))) < TOL

    print("KERNEL_OK")
</pallas_src>

<mosaic_0001>
module attributes {stable_mosaic.version = 11 : i64} {
  func.func @_gru_fc_kernel(%arg0: memref<1x2x384xf32, #tpu.memory_space<vmem>>, %arg1: memref<2x128xf32, #tpu.memory_space<vmem>>, %arg2: memref<128x384xf32, #tpu.memory_space<vmem>>, %arg3: memref<1x384xf32, #tpu.memory_space<vmem>>, %arg4: memref<128x128xf32, #tpu.memory_space<vmem>>, %arg5: memref<1x128xf32, #tpu.memory_space<vmem>>, %arg6: memref<1x2x128xf32, #tpu.memory_space<vmem>>, %arg7: memref<2x128xf32, #tpu.memory_space<vmem>>) attributes {dimension_semantics = [], scalar_prefetch = 0 : i64, scratch_operands = 0 : i64, tpu.core_type = #tpu.core_type<tc>} {
    %c0 = arith.constant 0 : index
    %c0_0 = arith.constant 0 : index
    %0 = vector.load %arg1[%c0, %c0_0] : memref<2x128xf32, #tpu.memory_space<vmem>>, vector<2x128xf32>
    %c0_i32 = arith.constant 0 : i32
    %1 = arith.index_cast %c0_i32 : i32 to index
    %c0_1 = arith.constant 0 : index
    %c0_2 = arith.constant 0 : index
    %2 = vector.load %arg0[%1, %c0_1, %c0_2] : memref<1x2x384xf32, #tpu.memory_space<vmem>>, vector<1x2x384xf32>
    %3 = vector.shape_cast %2 : vector<1x2x384xf32> to vector<2x384xf32>
    %c0_3 = arith.constant 0 : index
    %c0_4 = arith.constant 0 : index
    %4 = vector.load %arg2[%c0_3, %c0_4] : memref<128x384xf32, #tpu.memory_space<vmem>>, vector<128x384xf32>
    %cst = arith.constant dense<0.000000e+00> : vector<2x384xf32>
    %5 = tpu.matmul %0, %4, %cst {dimension_numbers = #tpu.dot_dimension_numbers<[1], [0], [0], [1], [0, 0, 1, 1], [], []>, precision = #tpu.contract_precision<fp32>} : vector<2x128xf32>, vector<128x384xf32>, vector<2x384xf32> -> vector<2x384xf32>
    %c0_5 = arith.constant 0 : index
    %c0_6 = arith.constant 0 : index
    %6 = vector.load %arg3[%c0_5, %c0_6] : memref<1x384xf32, #tpu.memory_space<vmem>>, vector<1x384xf32>
    %7 = vector.broadcast %6 : vector<1x384xf32> to vector<2x384xf32>
    %8 = arith.addf %5, %7 : vector<2x384xf32>
    %9 = vector.extract_strided_slice %3 {offsets = [0, 0], sizes = [2, 128], strides = [1, 1]} : vector<2x384xf32> to vector<2x128xf32>
    %10 = vector.extract_strided_slice %3 {offsets = [0, 128], sizes = [2, 128], strides = [1, 1]} : vector<2x384xf32> to vector<2x128xf32>
    %11 = vector.extract_strided_slice %3 {offsets = [0, 256], sizes = [2, 128], strides = [1, 1]} : vector<2x384xf32> to vector<2x128xf32>
    %12 = vector.extract_strided_slice %8 {offsets = [0, 0], sizes = [2, 128], strides = [1, 1]} : vector<2x384xf32> to vector<2x128xf32>
    %13 = vector.extract_strided_slice %8 {offsets = [0, 128], sizes = [2, 128], strides = [1, 1]} : vector<2x384xf32> to vector<2x128xf32>
    %14 = vector.extract_strided_slice %8 {offsets = [0, 256], sizes = [2, 128], strides = [1, 1]} : vector<2x384xf32> to vector<2x128xf32>
    %15 = arith.addf %9, %12 : vector<2x128xf32>
    %16 = arith.negf %15 : vector<2x128xf32>
    %17 = math.exp %16 : vector<2x128xf32>
    %cst_7 = arith.constant 1.000000e+00 : f32
    %18 = vector.broadcast %cst_7 : f32 to vector<2x128xf32>
    %19 = arith.addf %18, %17 : vector<2x128xf32>
    %20 = arith.divf %18, %19 : vector<2x128xf32>
    %21 = arith.addf %10, %13 : vector<2x128xf32>
    %22 = arith.negf %21 : vector<2x128xf32>
    %23 = math.exp %22 : vector<2x128xf32>
    %cst_8 = arith.constant 1.000000e+00 : f32
    %24 = vector.broadcast %cst_8 : f32 to vector<2x128xf32>
    %25 = arith.addf %24, %23 : vector<2x128xf32>
    %26 = arith.divf %24, %25 : vector<2x128xf32>
    %27 = arith.mulf %20, %14 : vector<2x128xf32>
    %28 = arith.addf %11, %27 : vector<2x128xf32>
    %29 = math.tanh %28 : vector<2x128xf32>
    %cst_9 = arith.constant 1.000000e+00 : f32
    %30 = vector.broadcast %cst_9 : f32 to vector<2x128xf32>
    %31 = arith.subf %30, %26 : vector<2x128xf32>
    %32 = arith.mulf %31, %29 : vector<2x128xf32>
    %33 = arith.mulf %26, %0 : vector<2x128xf32>
    %34 = arith.addf %32, %33 : vector<2x128xf32>
    %c0_10 = arith.constant 0 : index
    %c0_11 = arith.constant 0 : index
    %35 = vector.load %arg4[%c0_10, %c0_11] : memref<128x128xf32, #tpu.memory_space<vmem>>, vector<128x128xf32>
    %cst_12 = arith.constant dense<0.000000e+00> : vector<2x128xf32>
    %36 = tpu.matmul %34, %35, %cst_12 {dimension_numbers = #tpu.dot_dimension_numbers<[1], [0], [0], [1], [0, 0, 1, 1], [], []>, precision = #tpu.contract_precision<fp32>} : vector<2x128xf32>, vector<128x128xf32>, vector<2x128xf32> -> vector<2x128xf32>
    %c0_13 = arith.constant 0 : index
    %c0_14 = arith.constant 0 : index
    %37 = vector.load %arg5[%c0_13, %c0_14] : memref<1x128xf32, #tpu.memory_space<vmem>>, vector<1x128xf32>
    %38 = vector.broadcast %37 : vector<1x128xf32> to vector<2x128xf32>
    %39 = arith.addf %36, %38 : vector<2x128xf32>
    %40 = arith.index_cast %c0_i32 : i32 to index
    %c0_15 = arith.constant 0 : index
    %c0_16 = arith.constant 0 : index
    %41 = vector.load %arg6[%40, %c0_15, %c0_16] : memref<1x2x128xf32, #tpu.memory_space<vmem>>, vector<1x2x128xf32>
    %42 = vector.shape_cast %41 : vector<1x2x128xf32> to vector<2x128xf32>
    %43 = vector.shape_cast %39 : vector<2x128xf32> to vector<1x2x128xf32>
    tpu.vector_store %arg6[%40, %c0_15, %c0_16], %43 {strides = array<i32>} : memref<1x2x128xf32, #tpu.memory_space<vmem>>, vector<1x2x128xf32>,
    %c1_i32 = arith.constant 1 : i32
    %c0_17 = arith.constant 0 : index
    %c0_18 = arith.constant 0 : index
    %44 = vector.load %arg7[%c0_17, %c0_18] : memref<2x128xf32, #tpu.memory_space<vmem>>, vector<2x128xf32>
    tpu.vector_store %arg7[%c0_17, %c0_18], %34 {strides = array<i32>} : memref<2x128xf32, #tpu.memory_space<vmem>>, vector<2x128xf32>,
    return
  }
}

</mosaic_0001>

<llo_original>
// kernel: rnn_net_forward.1
$region0: #{rnn_net_forward.1}
  #allocation0 [shape = 'u32[]', space=smem, size = 0x4, offset = 0x4, fixed_abs, tag = 'smem constant byte address 0x4 - core index']
  #allocation1 [shape = 'u32[144,128]{1,0:T(1,128)}', space=vmem, size = 0x12000, scoped, tag = 'internal scratch']
  %s0 = inlined_call_operand.vmem [shape: f32[1,2,384], index: 0, kind: input, shape index: {}]
  %s1 = inlined_call_operand.vmem [shape: f32[2,128], index: 1, kind: input, shape index: {}]
  %s2 = inlined_call_operand.hbm [shape: f32[128,384], index: 2, kind: input, shape index: {}]
  %s3 = inlined_call_operand.vmem [shape: f32[1,384], index: 3, kind: input, shape index: {}]
  %s4 = inlined_call_operand.hbm [shape: f32[128,128], index: 4, kind: input, shape index: {}]
  %s5 = inlined_call_operand.vmem [shape: f32[1,128], index: 5, kind: input, shape index: {}]
  %s6 = inlined_call_operand.vmem [shape: f32[1,2,128], index: 6, kind: output, shape index: {0}]
  %s7 = inlined_call_operand.vmem [shape: f32[2,128], index: 7, kind: output, shape index: {1}]
  %8 = xla_tuple %s6, %s7
  %s9 = sld [smem:[#allocation0]]
  $region50: #{rnn_net_forward.1} parent=0
    _
  %s11 = ssub.s32 1, %s9
  %s12 = scalar_select 0, %s11, %s9
  $region1: #{rnn_net_forward.1} parent=0
    #allocation2 [shape = 'u8[196608]{0}', space=vmem, size = 0x30000, scoped, tag = 'input window, operand 2, single buffered']
    #allocation3 [shape = 's32[1]{0}', space=sflag, size = 0x4, scoped, tag = 'scoped memory for rnn_net_forward.1']
    #allocation4 [shape = 'u8[65536]{0}', space=vmem, size = 0x10000, scoped, tag = 'input window, operand 4, single buffered']
    #allocation5 [shape = 's32[1]{0}', space=sflag, size = 0x4, scoped, tag = 'scoped memory for rnn_net_forward.1']
    %13 = vsyncpa [#allocation3], 0
    %14 = vsyncpa [#allocation5], 0
    // Predicated region
    $region2: #{rnn_net_forward.1} parent=1 // pred_check
      _
    $region3: #{rnn_net_forward.1} parent=1 // pred_check_branch
      %16 = sbr.rel (0) target = $region5
    $region4: #{rnn_net_forward.1} parent=1 // pred_region
      _
    $region5: #{rnn_net_forward.1} parent=1 // pred_fallthru
      _
    // Predicated region
    $region6: #{rnn_net_forward.1} parent=1 // pred_check
      _
    $region7: #{rnn_net_forward.1} parent=1 // pred_check_branch
      %18 = sbr.rel (0) target = $region9
    $region8: #{rnn_net_forward.1} parent=1 // pred_region
      _
    $region9: #{rnn_net_forward.1} parent=1 // pred_fallthru
      _
    // Predicated region
    $region10: #{rnn_net_forward.1} parent=1 // pred_check
      _
    $region11: #{rnn_net_forward.1} parent=1 // pred_check_branch
      %20 = sbr.rel (0) target = $region13
    $region12: #{rnn_net_forward.1} parent=1 // pred_region
      %s22 = ssub.s32 6144, 6144
      %23 = vsyncadd [#allocation3], %s22
      %s24 = sshll.u32 [#allocation2], 4
      %s25 = int_to_ptr.vmem [resolvable:$true] %s24
      %30 = dma.hbm_to_vmem [thread:$0]  %s2, 6144, %s25, [#allocation3], 384, 384, 24
    $region13: #{rnn_net_forward.1} parent=1 // pred_fallthru
      _
    // Predicated region
    $region14: #{rnn_net_forward.1} parent=1 // pred_check
      _
    $region15: #{rnn_net_forward.1} parent=1 // pred_check_branch
      %32 = sbr.rel (0) target = $region17
    $region16: #{rnn_net_forward.1} parent=1 // pred_region
      _
    $region17: #{rnn_net_forward.1} parent=1 // pred_fallthru
      _
    // Predicated region
    $region18: #{rnn_net_forward.1} parent=1 // pred_check
      _
    $region19: #{rnn_net_forward.1} parent=1 // pred_check_branch
      %34 = sbr.rel (0) target = $region21
    $region20: #{rnn_net_forward.1} parent=1 // pred_region
      %s36 = ssub.s32 2048, 2048
      %37 = vsyncadd [#allocation5], %s36
      %s38 = sshll.u32 [#allocation4], 4
      %s39 = int_to_ptr.vmem [resolvable:$true] %s38
      %44 = dma.hbm_to_vmem [thread:$0]  %s4, 2048, %s39, [#allocation5], 128, 128, 8
    $region21: #{rnn_net_forward.1} parent=1 // pred_fallthru
      _
    // Predicated region
    $region22: #{rnn_net_forward.1} parent=1 // pred_check
      _
    $region23: #{rnn_net_forward.1} parent=1 // pred_check_branch
      %46 = sbr.rel (0) target = $region25
    $region24: #{rnn_net_forward.1} parent=1 // pred_region
      _
    $region25: #{rnn_net_forward.1} parent=1 // pred_fallthru
      _
    // Predicated region
    $region26: #{rnn_net_forward.1} parent=1 // pred_check
      _
    $region27: #{rnn_net_forward.1} parent=1 // pred_check_branch
      %48 = sbr.rel (0) target = $region29
    $region28: #{rnn_net_forward.1} parent=1 // pred_region
      %49 = dma.done [#allocation3], 6144
    $region29: #{rnn_net_forward.1} parent=1 // pred_fallthru
      _
    // Predicated region
    $region30: #{rnn_net_forward.1} parent=1 // pred_check
      _
    $region31: #{rnn_net_forward.1} parent=1 // pred_check_branch
      %51 = sbr.rel (0) target = $region33
    $region32: #{rnn_net_forward.1} parent=1 // pred_region
      %52 = dma.done [#allocation5], 2048
    $region33: #{rnn_net_forward.1} parent=1 // pred_fallthru
      _
    %v53 = vld [vmem:[%s1] sm:$0x3]
    %v54 = vld [vmem:[%s0] sm:$0x3f]
    %v55 = vld [vmem:[#allocation2] sm:$0xff]
    %v56 = vld [vmem:[#allocation2 + $0x8] sm:$0xff]
    %v57 = vld [vmem:[#allocation2 + $0x10] sm:$0xff]
    %v58 = vld [vmem:[#allocation2 + $0x18] sm:$0xff]
    %v59 = vld [vmem:[#allocation2 + $0x20] sm:$0xff]
    %v60 = vld [vmem:[#allocation2 + $0x28] sm:$0xff]
    %v61 = vld [vmem:[#allocation2 + $0x30] sm:$0xff]
    %v62 = vld [vmem:[#allocation2 + $0x38] sm:$0xff]
    %v63 = vld [vmem:[#allocation2 + $0x40] sm:$0xff]
    %v64 = vld [vmem:[#allocation2 + $0x48] sm:$0xff]
    %v65 = vld [vmem:[#allocation2 + $0x50] sm:$0xff]
    %v66 = vld [vmem:[#allocation2 + $0x58] sm:$0xff]
    %v67 = vld [vmem:[#allocation2 + $0x60] sm:$0xff]
    %v68 = vld [vmem:[#allocation2 + $0x68] sm:$0xff]
    %v69 = vld [vmem:[#allocation2 + $0x70] sm:$0xff]
    %v70 = vld [vmem:[#allocation2 + $0x78] sm:$0xff]
    %v71 = vld [vmem:[#allocation2 + $0x80] sm:$0xff]
    %v72 = vld [vmem:[#allocation2 + $0x88] sm:$0xff]
    %v73 = vld [vmem:[#allocation2 + $0x90] sm:$0xff]
    %v74 = vld [vmem:[#allocation2 + $0x98] sm:$0xff]
    %v75 = vld [vmem:[#allocation2 + $0xa0] sm:$0xff]
    %v76 = vld [vmem:[#allocation2 + $0xa8] sm:$0xff]
    %v77 = vld [vmem:[#allocation2 + $0xb0] sm:$0xff]
    %v78 = vld [vmem:[#allocation2 + $0xb8] sm:$0xff]
    %v79 = vld [vmem:[#allocation2 + $0xc0] sm:$0xff]
    %v80 = vld [vmem:[#allocation2 + $0xc8] sm:$0xff]
    %v81 = vld [vmem:[#allocation2 + $0xd0] sm:$0xff]
    %v82 = vld [vmem:[#allocation2 + $0xd8] sm:$0xff]
    %v83 = vld [vmem:[#allocation2 + $0xe0] sm:$0xff]
    %v84 = vld [vmem:[#allocation2 + $0xe8] sm:$0xff]
    %v85 = vld [vmem:[#allocation2 + $0xf0] sm:$0xff]
    %v86 = vld [vmem:[#allocation2 + $0xf8] sm:$0xff]
    %v87 = vld [vmem:[#allocation2 + $0x100] sm:$0xff]
    %v88 = vld [vmem:[#allocation2 + $0x108] sm:$0xff]
    %v89 = vld [vmem:[#allocation2 + $0x110] sm:$0xff]
    %v90 = vld [vmem:[#allocation2 + $0x118] sm:$0xff]
    %v91 = vld [vmem:[#allocation2 + $0x120] sm:$0xff]
    %v92 = vld [vmem:[#allocation2 + $0x128] sm:$0xff]
    %v93 = vld [vmem:[#allocation2 + $0x130] sm:$0xff]
    %v94 = vld [vmem:[#allocation2 + $0x138] sm:$0xff]
    %v95 = vld [vmem:[#allocation2 + $0x140] sm:$0xff]
    %v96 = vld [vmem:[#allocation2 + $0x148] sm:$0xff]
    %v97 = vld [vmem:[#allocation2 + $0x150] sm:$0xff]
    %v98 = vld [vmem:[#allocation2 + $0x158] sm:$0xff]
    %v99 = vld [vmem:[#allocation2 + $0x160] sm:$0xff]
    %v100 = vld [vmem:[#allocation2 + $0x168] sm:$0xff]
    %v101 = vld [vmem:[#allocation2 + $0x170] sm:$0xff]
    %v102 = vld [vmem:[#allocation2 + $0x178] sm:$0xff]
    %v103 = vld [vmem:[%s3] sm:$0x7]
    %v105 = vlaneseq
    %v106 = vshrl.u32 %v105, 7
    %v107 = vsub.s32 0, %v106
    %v108 = vrot.slane %v103, %v107
    %v109 = vlaneseq
    %v110 = vshrl.u32 %v109, 7
    %v111 = vsub.s32 1, %v110
    %v112 = vrot.slane %v103, %v111
    %v113 = vlaneseq
    %v114 = vshrl.u32 %v113, 7
    %v115 = vsub.s32 2, %v114
    %v116 = vrot.slane %v103, %v115
    %v120 = vand.u32 %v56, 4294901760
    %121 = vmatprep.subr.mxu0 %v120
    %v122 = vand.u32 %v55, 4294901760
    %123 = vmatpush1.msra.mxu0 %v122
    %v124 = vand.u32 %v59, 4294901760
    %125 = vmatprep.subr.mxu0 %v124
    %v126 = vand.u32 %v58, 4294901760
    %127 = vmatpush1.msra.mxu0 %v126
    %v128 = vand.u32 %v62, 4294901760
    %129 = vmatprep.subr.mxu0 %v128
    %v130 = vand.u32 %v61, 4294901760
    %131 = vmatpush1.msra.mxu0 %v130
    %v132 = vand.u32 %v65, 4294901760
    %133 = vmatprep.subr.mxu0 %v132
    %v134 = vand.u32 %v64, 4294901760
    %135 = vmatpush1.msra.mxu0 %v134
    %v136 = vand.u32 %v68, 4294901760
    %137 = vmatprep.subr.mxu0 %v136
    %v138 = vand.u32 %v67, 4294901760
    %139 = vmatpush1.msra.mxu0 %v138
    %v140 = vand.u32 %v71, 4294901760
    %141 = vmatprep.subr.mxu0 %v140
    %v142 = vand.u32 %v70, 4294901760
    %143 = vmatpush1.msra.mxu0 %v142
    %v144 = vand.u32 %v74, 4294901760
    %145 = vmatprep.subr.mxu0 %v144
    %v146 = vand.u32 %v73, 4294901760
    %147 = vmatpush1.msra.mxu0 %v146
    %v148 = vand.u32 %v77, 4294901760
    %149 = vmatprep.subr.mxu0 %v148
    %v150 = vand.u32 %v76, 4294901760
    %151 = vmatpush1.msra.mxu0 %v150
    %v152 = vand.u32 %v80, 4294901760
    %153 = vmatprep.subr.mxu0 %v152
    %v154 = vand.u32 %v79, 4294901760
    %155 = vmatpush1.msra.mxu0 %v154
    %v156 = vand.u32 %v83, 4294901760
    %157 = vmatprep.subr.mxu0 %v156
    %v158 = vand.u32 %v82, 4294901760
    %159 = vmatpush1.msra.mxu0 %v158
    %v160 = vand.u32 %v86, 4294901760
    %161 = vmatprep.subr.mxu0 %v160
    %v162 = vand.u32 %v85, 4294901760
    %163 = vmatpush1.msra.mxu0 %v162
    %v164 = vand.u32 %v89, 4294901760
    %165 = vmatprep.subr.mxu0 %v164
    %v166 = vand.u32 %v88, 4294901760
    %167 = vmatpush1.msra.mxu0 %v166
    %v168 = vand.u32 %v92, 4294901760
    %169 = vmatprep.subr.mxu0 %v168
    %v170 = vand.u32 %v91, 4294901760
    %171 = vmatpush1.msra.mxu0 %v170
    %v172 = vand.u32 %v95, 4294901760
    %173 = vmatprep.subr.mxu0 %v172
    %v174 = vand.u32 %v94, 4294901760
    %175 = vmatpush1.msra.mxu0 %v174
    %v176 = vand.u32 %v98, 4294901760
    %177 = vmatprep.subr.mxu0 %v176
    %v178 = vand.u32 %v97, 4294901760
    %179 = vmatpush1.msra.mxu0 %v178
    %v180 = vand.u32 %v101, 4294901760
    %181 = vmatprep.subr.mxu0 %v180
    %v182 = vand.u32 %v100, 4294901760
    %183 = vmatpush1.msra.mxu0 %v182
    %184 = vmatprep.subr.mxu0 0.0
    %185 = vmatpush1.msra.mxu0 0.0
    %186 = vmatprep.subr.mxu0 0.0
    %187 = vmatpush1.msra.mxu0 0.0
    %188 = vmatprep.subr.mxu0 0.0
    %189 = vmatpush1.msra.mxu0 0.0
    %190 = vmatprep.subr.mxu0 0.0
    %191 = vmatpush1.msra.mxu0 0.0
    %192 = vmatprep.subr.mxu0 0.0
    %193 = vmatpush1.msra.mxu0 0.0
    %194 = vmatprep.subr.mxu0 0.0
    %195 = vmatpush1.msra.mxu0 0.0
    %196 = vmatprep.subr.mxu0 0.0
    %197 = vmatpush1.msra.mxu0 0.0
    %198 = vmatprep.subr.mxu0 0.0
    %199 = vmatpush1.msra.mxu0 0.0
    %200 = vmatprep.subr.mxu0 0.0
    %201 = vmatpush1.msra.mxu0 0.0
    %202 = vmatprep.subr.mxu0 0.0
    %203 = vmatpush1.msra.mxu0 0.0
    %204 = vmatprep.subr.mxu0 0.0
    %205 = vmatpush1.msra.mxu0 0.0
    %206 = vmatprep.subr.mxu0 0.0
    %207 = vmatpush1.msra.mxu0 0.0
    %208 = vmatprep.subr.mxu0 0.0
    %209 = vmatpush1.msra.mxu0 0.0
    %210 = vmatprep.subr.mxu0 0.0
    %211 = vmatpush1.msra.mxu0 0.0
    %212 = vmatprep.subr.mxu0 0.0
    %213 = vmatpush1.msra.mxu0 0.0
    %214 = vmatprep.subr.mxu0 0.0
    %215 = vmatpush1.msra.mxu0 0.0
    %216 = vmatprep.mubr.f32.mxu0 0.0
    %v217 = vand.u32 %v53, 4294901760
    %v218 = vsub.f32 %v53, %v217
    %v219 = vand.u32 %v218, 4294901760
    %v220 = vsub.f32 %v218, %v219
    %v221 = vand.u32 %v220, 4294901760
    %222 = vmatmul.mubr.f32.gmra.mrb[0].mxu0 %v221
    %v223 = vpop.f32.mrb[0].mxu0
    %v224 = vadd.f32 %v108, %v223
    %v225 = vpop.f32.mrb[0].mxu0
    %v226 = vadd.f32 %v112, %v225
    %227 = vdwg.mxu0
    %v228 = vand.u32 %v56, 4294901760
    %v229 = vsub.f32 %v56, %v228
    %v230 = vand.u32 %v229, 4294901760
    %v231 = vsub.f32 %v229, %v230
    %v232 = vand.u32 %v231, 4294901760
    %233 = vmatprep.subr.mxu0 %v232
    %v234 = vand.u32 %v55, 4294901760
    %v235 = vsub.f32 %v55, %v234
    %v236 = vand.u32 %v235, 4294901760
    %v237 = vsub.f32 %v235, %v236
    %v238 = vand.u32 %v237, 4294901760
    %239 = vmatpush1.msra.mxu0 %v238
    %v240 = vand.u32 %v59, 4294901760
    %v241 = vsub.f32 %v59, %v240
    %v242 = vand.u32 %v241, 4294901760
    %v243 = vsub.f32 %v241, %v242
    %v244 = vand.u32 %v243, 4294901760
    %245 = vmatprep.subr.mxu0 %v244
    %v246 = vand.u32 %v58, 4294901760
    %v247 = vsub.f32 %v58, %v246
    %v248 = vand.u32 %v247, 4294901760
    %v249 = vsub.f32 %v247, %v248
    %v250 = vand.u32 %v249, 4294901760
    %251 = vmatpush1.msra.mxu0 %v250
    %v252 = vand.u32 %v62, 4294901760
    %v253 = vsub.f32 %v62, %v252
    %v254 = vand.u32 %v253, 4294901760
    %v255 = vsub.f32 %v253, %v254
    %v256 = vand.u32 %v255, 4294901760
    %257 = vmatprep.subr.mxu0 %v256
    %v258 = vand.u32 %v61, 4294901760
    %v259 = vsub.f32 %v61, %v258
    %v260 = vand.u32 %v259, 4294901760
    %v261 = vsub.f32 %v259, %v260
    %v262 = vand.u32 %v261, 4294901760
    %263 = vmatpush1.msra.mxu0 %v262
    %v264 = vand.u32 %v65, 4294901760
    %v265 = vsub.f32 %v65, %v264
    %v266 = vand.u32 %v265, 4294901760
    %v267 = vsub.f32 %v265, %v266
    %v268 = vand.u32 %v267, 4294901760
    %269 = vmatprep.subr.mxu0 %v268
    %v270 = vand.u32 %v64, 4294901760
    %v271 = vsub.f32 %v64, %v270
    %v272 = vand.u32 %v271, 4294901760
    %v273 = vsub.f32 %v271, %v272
    %v274 = vand.u32 %v273, 4294901760
    %275 = vmatpush1.msra.mxu0 %v274
    %v276 = vand.u32 %v68, 4294901760
    %v277 = vsub.f32 %v68, %v276
    %v278 = vand.u32 %v277, 4294901760
    %v279 = vsub.f32 %v277, %v278
    %v280 = vand.u32 %v279, 4294901760
    %281 = vmatprep.subr.mxu0 %v280
    %v282 = vand.u32 %v67, 4294901760
    %v283 = vsub.f32 %v67, %v282
    %v284 = vand.u32 %v283, 4294901760
    %v285 = vsub.f32 %v283, %v284
    %v286 = vand.u32 %v285, 4294901760
    %287 = vmatpush1.msra.mxu0 %v286
    %v288 = vand.u32 %v71, 4294901760
    %v289 = vsub.f32 %v71, %v288
    %v290 = vand.u32 %v289, 4294901760
    %v291 = vsub.f32 %v289, %v290
    %v292 = vand.u32 %v291, 4294901760
    %293 = vmatprep.subr.mxu0 %v292
    %v294 = vand.u32 %v70, 4294901760
    %v295 = vsub.f32 %v70, %v294
    %v296 = vand.u32 %v295, 4294901760
    %v297 = vsub.f32 %v295, %v296
    %v298 = vand.u32 %v297, 4294901760
    %299 = vmatpush1.msra.mxu0 %v298
    %v300 = vand.u32 %v74, 4294901760
    %v301 = vsub.f32 %v74, %v300
    %v302 = vand.u32 %v301, 4294901760
    %v303 = vsub.f32 %v301, %v302
    %v304 = vand.u32 %v303, 4294901760
    %305 = vmatprep.subr.mxu0 %v304
    %v306 = vand.u32 %v73, 4294901760
    %v307 = vsub.f32 %v73, %v306
    %v308 = vand.u32 %v307, 4294901760
    %v309 = vsub.f32 %v307, %v308
    %v310 = vand.u32 %v309, 4294901760
    %311 = vmatpush1.msra.mxu0 %v310
    %v312 = vand.u32 %v77, 4294901760
    %v313 = vsub.f32 %v77, %v312
    %v314 = vand.u32 %v313, 4294901760
    %v315 = vsub.f32 %v313, %v314
    %v316 = vand.u32 %v315, 4294901760
    %317 = vmatprep.subr.mxu0 %v316
    %v318 = vand.u32 %v76, 4294901760
    %v319 = vsub.f32 %v76, %v318
    %v320 = vand.u32 %v319, 4294901760
    %v321 = vsub.f32 %v319, %v320
    %v322 = vand.u32 %v321, 4294901760
    %323 = vmatpush1.msra.mxu0 %v322
    %v324 = vand.u32 %v80, 4294901760
    %v325 = vsub.f32 %v80, %v324
    %v326 = vand.u32 %v325, 4294901760
    %v327 = vsub.f32 %v325, %v326
    %v328 = vand.u32 %v327, 4294901760
    %329 = vmatprep.subr.mxu0 %v328
    %v330 = vand.u32 %v79, 4294901760
    %v331 = vsub.f32 %v79, %v330
    %v332 = vand.u32 %v331, 4294901760
    %v333 = vsub.f32 %v331, %v332
    %v334 = vand.u32 %v333, 4294901760
    %335 = vmatpush1.msra.mxu0 %v334
    %v336 = vand.u32 %v83, 4294901760
    %v337 = vsub.f32 %v83, %v336
    %v338 = vand.u32 %v337, 4294901760
    %v339 = vsub.f32 %v337, %v338
    %v340 = vand.u32 %v339, 4294901760
    %341 = vmatprep.subr.mxu0 %v340
    %v342 = vand.u32 %v82, 4294901760
    %v343 = vsub.f32 %v82, %v342
    %v344 = vand.u32 %v343, 4294901760
    %v345 = vsub.f32 %v343, %v344
    %v346 = vand.u32 %v345, 4294901760
    %347 = vmatpush1.msra.mxu0 %v346
    %v348 = vand.u32 %v86, 4294901760
    %v349 = vsub.f32 %v86, %v348
    %v350 = vand.u32 %v349, 4294901760
    %v351 = vsub.f32 %v349, %v350
    %v352 = vand.u32 %v351, 4294901760
    %353 = vmatprep.subr.mxu0 %v352
    %v354 = vand.u32 %v85, 4294901760
    %v355 = vsub.f32 %v85, %v354
    %v356 = vand.u32 %v355, 4294901760
    %v357 = vsub.f32 %v355, %v356
    %v358 = vand.u32 %v357, 4294901760
    %359 = vmatpush1.msra.mxu0 %v358
    %v360 = vand.u32 %v89, 4294901760
    %v361 = vsub.f32 %v89, %v360
    %v362 = vand.u32 %v361, 4294901760
    %v363 = vsub.f32 %v361, %v362
    %v364 = vand.u32 %v363, 4294901760
    %365 = vmatprep.subr.mxu0 %v364
    %v366 = vand.u32 %v88, 4294901760
    %v367 = vsub.f32 %v88, %v366
    %v368 = vand.u32 %v367, 4294901760
    %v369 = vsub.f32 %v367, %v368
    %v370 = vand.u32 %v369, 4294901760
    %371 = vmatpush1.msra.mxu0 %v370
    %v372 = vand.u32 %v92, 4294901760
    %v373 = vsub.f32 %v92, %v372
    %v374 = vand.u32 %v373, 4294901760
    %v375 = vsub.f32 %v373, %v374
    %v376 = vand.u32 %v375, 4294901760
    %377 = vmatprep.subr.mxu0 %v376
    %v378 = vand.u32 %v91, 4294901760
    %v379 = vsub.f32 %v91, %v378
    %v380 = vand.u32 %v379, 4294901760
    %v381 = vsub.f32 %v379, %v380
    %v382 = vand.u32 %v381, 4294901760
    %383 = vmatpush1.msra.mxu0 %v382
    %v384 = vand.u32 %v95, 4294901760
    %v385 = vsub.f32 %v95, %v384
    %v386 = vand.u32 %v385, 4294901760
    %v387 = vsub.f32 %v385, %v386
    %v388 = vand.u32 %v387, 4294901760
    %389 = vmatprep.subr.mxu0 %v388
    %v390 = vand.u32 %v94, 4294901760
    %v391 = vsub.f32 %v94, %v390
    %v392 = vand.u32 %v391, 4294901760
    %v393 = vsub.f32 %v391, %v392
    %v394 = vand.u32 %v393, 4294901760
    %395 = vmatpush1.msra.mxu0 %v394
    %v396 = vand.u32 %v98, 4294901760
    %v397 = vsub.f32 %v98, %v396
    %v398 = vand.u32 %v397, 4294901760
    %v399 = vsub.f32 %v397, %v398
    %v400 = vand.u32 %v399, 4294901760
    %401 = vmatprep.subr.mxu0 %v400
    %v402 = vand.u32 %v97, 4294901760
    %v403 = vsub.f32 %v97, %v402
    %v404 = vand.u32 %v403, 4294901760
    %v405 = vsub.f32 %v403, %v404
    %v406 = vand.u32 %v405, 4294901760
    %407 = vmatpush1.msra.mxu0 %v406
    %v408 = vand.u32 %v101, 4294901760
    %v409 = vsub.f32 %v101, %v408
    %v410 = vand.u32 %v409, 4294901760
    %v411 = vsub.f32 %v409, %v410
    %v412 = vand.u32 %v411, 4294901760
    %413 = vmatprep.subr.mxu0 %v412
    %v414 = vand.u32 %v100, 4294901760
    %v415 = vsub.f32 %v100, %v414
    %v416 = vand.u32 %v415, 4294901760
    %v417 = vsub.f32 %v415, %v416
    %v418 = vand.u32 %v417, 4294901760
    %419 = vmatpush1.msra.mxu0 %v418
    %420 = vmatprep.subr.mxu0 0.0
    %421 = vmatpush1.msra.mxu0 0.0
    %422 = vmatprep.subr.mxu0 0.0
    %423 = vmatpush1.msra.mxu0 0.0
    %424 = vmatprep.subr.mxu0 0.0
    %425 = vmatpush1.msra.mxu0 0.0
    %426 = vmatprep.subr.mxu0 0.0
    %427 = vmatpush1.msra.mxu0 0.0
    %428 = vmatprep.subr.mxu0 0.0
    %429 = vmatpush1.msra.mxu0 0.0
    %430 = vmatprep.subr.mxu0 0.0
    %431 = vmatpush1.msra.mxu0 0.0
    %432 = vmatprep.subr.mxu0 0.0
    %433 = vmatpush1.msra.mxu0 0.0
    %434 = vmatprep.subr.mxu0 0.0
    %435 = vmatpush1.msra.mxu0 0.0
    %436 = vmatprep.subr.mxu0 0.0
    %437 = vmatpush1.msra.mxu0 0.0
    %438 = vmatprep.subr.mxu0 0.0
    %439 = vmatpush1.msra.mxu0 0.0
    %440 = vmatprep.subr.mxu0 0.0
    %441 = vmatpush1.msra.mxu0 0.0
    %442 = vmatprep.subr.mxu0 0.0
    %443 = vmatpush1.msra.mxu0 0.0
    %444 = vmatprep.subr.mxu0 0.0
    %445 = vmatpush1.msra.mxu0 0.0
    %446 = vmatprep.subr.mxu0 0.0
    %447 = vmatpush1.msra.mxu0 0.0
    %448 = vmatprep.subr.mxu0 0.0
    %449 = vmatpush1.msra.mxu0 0.0
    %450 = vmatprep.subr.mxu0 0.0
    %451 = vmatpush1.msra.mxu0 0.0
    %452 = vmatprep.mubr.f32.mxu0 0.0
    %v453 = vand.u32 %v53, 4294901760
    %454 = vmatmul.mubr.f32.gmra.mrb[0].mxu0 %v453
    %v455 = vpop.f32.mrb[0].mxu0
    %v456 = vadd.f32 %v224, %v455
    %v457 = vpop.f32.mrb[0].mxu0
    %v458 = vadd.f32 %v226, %v457
    %459 = vdwg.mxu0
    %v460 = vand.u32 %v56, 4294901760
    %v461 = vsub.f32 %v56, %v460
    %462 = vmatprep.subr.mxu0 %v461
    %v463 = vand.u32 %v55, 4294901760
    %v464 = vsub.f32 %v55, %v463
    %465 = vmatpush1.msra.mxu0 %v464
    %v466 = vand.u32 %v59, 4294901760
    %v467 = vsub.f32 %v59, %v466
    %468 = vmatprep.subr.mxu0 %v467
    %v469 = vand.u32 %v58, 4294901760
    %v470 = vsub.f32 %v58, %v469
    %471 = vmatpush1.msra.mxu0 %v470
    %v472 = vand.u32 %v62, 4294901760
    %v473 = vsub.f32 %v62, %v472
    %474 = vmatprep.subr.mxu0 %v473
    %v475 = vand.u32 %v61, 4294901760
    %v476 = vsub.f32 %v61, %v475
    %477 = vmatpush1.msra.mxu0 %v476
    %v478 = vand.u32 %v65, 4294901760
    %v479 = vsub.f32 %v65, %v478
    %480 = vmatprep.subr.mxu0 %v479
    %v481 = vand.u32 %v64, 4294901760
    %v482 = vsub.f32 %v64, %v481
    %483 = vmatpush1.msra.mxu0 %v482
    %v484 = vand.u32 %v68, 4294901760
    %v485 = vsub.f32 %v68, %v484
    %486 = vmatprep.subr.mxu0 %v485
    %v487 = vand.u32 %v67, 4294901760
    %v488 = vsub.f32 %v67, %v487
    %489 = vmatpush1.msra.mxu0 %v488
    %v490 = vand.u32 %v71, 4294901760
    %v491 = vsub.f32 %v71, %v490
    %492 = vmatprep.subr.mxu0 %v491
    %v493 = vand.u32 %v70, 4294901760
    %v494 = vsub.f32 %v70, %v493
    %495 = vmatpush1.msra.mxu0 %v494
    %v496 = vand.u32 %v74, 4294901760
    %v497 = vsub.f32 %v74, %v496
    %498 = vmatprep.subr.mxu0 %v497
    %v499 = vand.u32 %v73, 4294901760
    %v500 = vsub.f32 %v73, %v499
    %501 = vmatpush1.msra.mxu0 %v500
    %v502 = vand.u32 %v77, 4294901760
    %v503 = vsub.f32 %v77, %v502
    %504 = vmatprep.subr.mxu0 %v503
    %v505 = vand.u32 %v76, 4294901760
    %v506 = vsub.f32 %v76, %v505
    %507 = vmatpush1.msra.mxu0 %v506
    %v508 = vand.u32 %v80, 4294901760
    %v509 = vsub.f32 %v80, %v508
    %510 = vmatprep.subr.mxu0 %v509
    %v511 = vand.u32 %v79, 4294901760
    %v512 = vsub.f32 %v79, %v511
    %513 = vmatpush1.msra.mxu0 %v512
    %v514 = vand.u32 %v83, 4294901760
    %v515 = vsub.f32 %v83, %v514
    %516 = vmatprep.subr.mxu0 %v515
    %v517 = vand.u32 %v82, 4294901760
    %v518 = vsub.f32 %v82, %v517
    %519 = vmatpush1.msra.mxu0 %v518
    %v520 = vand.u32 %v86, 4294901760
    %v521 = vsub.f32 %v86, %v520
    %522 = vmatprep.subr.mxu0 %v521
    %v523 = vand.u32 %v85, 4294901760
    %v524 = vsub.f32 %v85, %v523
    %525 = vmatpush1.msra.mxu0 %v524
    %v526 = vand.u32 %v89, 4294901760
    %v527 = vsub.f32 %v89, %v526
    %528 = vmatprep.subr.mxu0 %v527
    %v529 = vand.u32 %v88, 4294901760
    %v530 = vsub.f32 %v88, %v529
    %531 = vmatpush1.msra.mxu0 %v530
    %v532 = vand.u32 %v92, 4294901760
    %v533 = vsub.f32 %v92, %v532
    %534 = vmatprep.subr.mxu0 %v533
    %v535 = vand.u32 %v91, 4294901760
    %v536 = vsub.f32 %v91, %v535
    %537 = vmatpush1.msra.mxu0 %v536
    %v538 = vand.u32 %v95, 4294901760
    %v539 = vsub.f32 %v95, %v538
    %540 = vmatprep.subr.mxu0 %v539
    %v541 = vand.u32 %v94, 4294901760
    %v542 = vsub.f32 %v94, %v541
    %543 = vmatpush1.msra.mxu0 %v542
    %v544 = vand.u32 %v98, 4294901760
    %v545 = vsub.f32 %v98, %v544
    %546 = vmatprep.subr.mxu0 %v545
    %v547 = vand.u32 %v97, 4294901760
    %v548 = vsub.f32 %v97, %v547
    %549 = vmatpush1.msra.mxu0 %v548
    %v550 = vand.u32 %v101, 4294901760
    %v551 = vsub.f32 %v101, %v550
    %552 = vmatprep.subr.mxu0 %v551
    %v553 = vand.u32 %v100, 4294901760
    %v554 = vsub.f32 %v100, %v553
    %555 = vmatpush1.msra.mxu0 %v554
    %556 = vmatprep.subr.mxu0 0.0
    %557 = vmatpush1.msra.mxu0 0.0
    %558 = vmatprep.subr.mxu0 0.0
    %559 = vmatpush1.msra.mxu0 0.0
    %560 = vmatprep.subr.mxu0 0.0
    %561 = vmatpush1.msra.mxu0 0.0
    %562 = vmatprep.subr.mxu0 0.0
    %563 = vmatpush1.msra.mxu0 0.0
    %564 = vmatprep.subr.mxu0 0.0
    %565 = vmatpush1.msra.mxu0 0.0
    %566 = vmatprep.subr.mxu0 0.0
    %567 = vmatpush1.msra.mxu0 0.0
    %568 = vmatprep.subr.mxu0 0.0
    %569 = vmatpush1.msra.mxu0 0.0
    %570 = vmatprep.subr.mxu0 0.0
    %571 = vmatpush1.msra.mxu0 0.0
    %572 = vmatprep.subr.mxu0 0.0
    %573 = vmatpush1.msra.mxu0 0.0
    %574 = vmatprep.subr.mxu0 0.0
    %575 = vmatpush1.msra.mxu0 0.0
    %576 = vmatprep.subr.mxu0 0.0
    %577 = vmatpush1.msra.mxu0 0.0
    %578 = vmatprep.subr.mxu0 0.0
    %579 = vmatpush1.msra.mxu0 0.0
    %580 = vmatprep.subr.mxu0 0.0
    %581 = vmatpush1.msra.mxu0 0.0
    %582 = vmatprep.subr.mxu0 0.0
    %583 = vmatpush1.msra.mxu0 0.0
    %584 = vmatprep.subr.mxu0 0.0
    %585 = vmatpush1.msra.mxu0 0.0
    %586 = vmatprep.subr.mxu0 0.0
    %587 = vmatpush1.msra.mxu0 0.0
    %588 = vmatprep.mubr.f32.mxu0 0.0
    %v589 = vand.u32 %v53, 4294901760
    %v590 = vsub.f32 %v53, %v589
    %591 = vmatmul.mubr.f32.gmra.mrb[0].mxu0 %v590
    %v592 = vpop.f32.mrb[0].mxu0
    %v593 = vadd.f32 %v456, %v592
    %v594 = vpop.f32.mrb[0].mxu0
    %v595 = vadd.f32 %v458, %v594
    %596 = vdwg.mxu0
    %v597 = vand.u32 %v56, 4294901760
    %598 = vmatprep.subr.mxu0 %v597
    %v599 = vand.u32 %v55, 4294901760
    %600 = vmatpush1.msra.mxu0 %v599
    %v601 = vand.u32 %v59, 4294901760
    %602 = vmatprep.subr.mxu0 %v601
    %v603 = vand.u32 %v58, 4294901760
    %604 = vmatpush1.msra.mxu0 %v603
    %v605 = vand.u32 %v62, 4294901760
    %606 = vmatprep.subr.mxu0 %v605
    %v607 = vand.u32 %v61, 4294901760
    %608 = vmatpush1.msra.mxu0 %v607
    %v609 = vand.u32 %v65, 4294901760
    %610 = vmatprep.subr.mxu0 %v609
    %v611 = vand.u32 %v64, 4294901760
    %612 = vmatpush1.msra.mxu0 %v611
    %v613 = vand.u32 %v68, 4294901760
    %614 = vmatprep.subr.mxu0 %v613
    %v615 = vand.u32 %v67, 4294901760
    %616 = vmatpush1.msra.mxu0 %v615
    %v617 = vand.u32 %v71, 4294901760
    %618 = vmatprep.subr.mxu0 %v617
    %v619 = vand.u32 %v70, 4294901760
    %620 = vmatpush1.msra.mxu0 %v619
    %v621 = vand.u32 %v74, 4294901760
    %622 = vmatprep.subr.mxu0 %v621
    %v623 = vand.u32 %v73, 4294901760
    %624 = vmatpush1.msra.mxu0 %v623
    %v625 = vand.u32 %v77, 4294901760
    %626 = vmatprep.subr.mxu0 %v625
    %v627 = vand.u32 %v76, 4294901760
    %628 = vmatpush1.msra.mxu0 %v627
    %v629 = vand.u32 %v80, 4294901760
    %630 = vmatprep.subr.mxu0 %v629
    %v631 = vand.u32 %v79, 4294901760
    %632 = vmatpush1.msra.mxu0 %v631
    %v633 = vand.u32 %v83, 4294901760
    %634 = vmatprep.subr.mxu0 %v633
    %v635 = vand.u32 %v82, 4294901760
    %636 = vmatpush1.msra.mxu0 %v635
    %v637 = vand.u32 %v86, 4294901760
    %638 = vmatprep.subr.mxu0 %v637
    %v639 = vand.u32 %v85, 4294901760
    %640 = vmatpush1.msra.mxu0 %v639
    %v641 = vand.u32 %v89, 4294901760
    %642 = vmatprep.subr.mxu0 %v641
    %v643 = vand.u32 %v88, 4294901760
    %644 = vmatpush1.msra.mxu0 %v643
    %v645 = vand.u32 %v92, 4294901760
    %646 = vmatprep.subr.mxu0 %v645
    %v647 = vand.u32 %v91, 4294901760
    %648 = vmatpush1.msra.mxu0 %v647
    %v649 = vand.u32 %v95, 4294901760
    %650 = vmatprep.subr.mxu0 %v649
    %v651 = vand.u32 %v94, 4294901760
    %652 = vmatpush1.msra.mxu0 %v651
    %v653 = vand.u32 %v98, 4294901760
    %654 = vmatprep.subr.mxu0 %v653
    %v655 = vand.u32 %v97, 4294901760
    %656 = vmatpush1.msra.mxu0 %v655
    %v657 = vand.u32 %v101, 4294901760
    %658 = vmatprep.subr.mxu0 %v657
    %v659 = vand.u32 %v100, 4294901760
    %660 = vmatpush1.msra.mxu0 %v659
    %661 = vmatprep.subr.mxu0 0.0
    %662 = vmatpush1.msra.mxu0 0.0
    %663 = vmatprep.subr.mxu0 0.0
    %664 = vmatpush1.msra.mxu0 0.0
    %665 = vmatprep.subr.mxu0 0.0
    %666 = vmatpush1.msra.mxu0 0.0
    %667 = vmatprep.subr.mxu0 0.0
    %668 = vmatpush1.msra.mxu0 0.0
    %669 = vmatprep.subr.mxu0 0.0
    %670 = vmatpush1.msra.mxu0 0.0
    %671 = vmatprep.subr.mxu0 0.0
    %672 = vmatpush1.msra.mxu0 0.0
    %673 = vmatprep.subr.mxu0 0.0
    %674 = vmatpush1.msra.mxu0 0.0
    %675 = vmatprep.subr.mxu0 0.0
    %676 = vmatpush1.msra.mxu0 0.0
    %677 = vmatprep.subr.mxu0 0.0
    %678 = vmatpush1.msra.mxu0 0.0
    %679 = vmatprep.subr.mxu0 0.0
    %680 = vmatpush1.msra.mxu0 0.0
    %681 = vmatprep.subr.mxu0 0.0
    %682 = vmatpush1.msra.mxu0 0.0
    %683 = vmatprep.subr.mxu0 0.0
    %684 = vmatpush1.msra.mxu0 0.0
    %685 = vmatprep.subr.mxu0 0.0
    %686 = vmatpush1.msra.mxu0 0.0
    %687 = vmatprep.subr.mxu0 0.0
    %688 = vmatpush1.msra.mxu0 0.0
    %689 = vmatprep.subr.mxu0 0.0
    %690 = vmatpush1.msra.mxu0 0.0
    %691 = vmatprep.subr.mxu0 0.0
    %692 = vmatpush1.msra.mxu0 0.0
    %693 = vmatprep.mubr.f32.mxu0 0.0
    %v694 = vand.u32 %v53, 4294901760
    %v695 = vsub.f32 %v53, %v694
    %v696 = vand.u32 %v695, 4294901760
    %697 = vmatmul.mubr.f32.gmra.mrb[0].mxu0 %v696
    %v698 = vpop.f32.mrb[0].mxu0
    %v699 = vadd.f32 %v593, %v698
    %v700 = vpop.f32.mrb[0].mxu0
    %v701 = vadd.f32 %v595, %v700
    %702 = vdwg.mxu0
    %v703 = vand.u32 %v56, 4294901760
    %v704 = vsub.f32 %v56, %v703
    %v705 = vand.u32 %v704, 4294901760
    %706 = vmatprep.subr.mxu0 %v705
    %v707 = vand.u32 %v55, 4294901760
    %v708 = vsub.f32 %v55, %v707
    %v709 = vand.u32 %v708, 4294901760
    %710 = vmatpush1.msra.mxu0 %v709
    %v711 = vand.u32 %v59, 4294901760
    %v712 = vsub.f32 %v59, %v711
    %v713 = vand.u32 %v712, 4294901760
    %714 = vmatprep.subr.mxu0 %v713
    %v715 = vand.u32 %v58, 4294901760
    %v716 = vsub.f32 %v58, %v715
    %v717 = vand.u32 %v716, 4294901760
    %718 = vmatpush1.msra.mxu0 %v717
    %v719 = vand.u32 %v62, 4294901760
    %v720 = vsub.f32 %v62, %v719
    %v721 = vand.u32 %v720, 4294901760
    %722 = vmatprep.subr.mxu0 %v721
    %v723 = vand.u32 %v61, 4294901760
    %v724 = vsub.f32 %v61, %v723
    %v725 = vand.u32 %v724, 4294901760
    %726 = vmatpush1.msra.mxu0 %v725
    %v727 = vand.u32 %v65, 4294901760
    %v728 = vsub.f32 %v65, %v727
    %v729 = vand.u32 %v728, 4294901760
    %730 = vmatprep.subr.mxu0 %v729
    %v731 = vand.u32 %v64, 4294901760
    %v732 = vsub.f32 %v64, %v731
    %v733 = vand.u32 %v732, 4294901760
    %734 = vmatpush1.msra.mxu0 %v733
    %v735 = vand.u32 %v68, 4294901760
    %v736 = vsub.f32 %v68, %v735
    %v737 = vand.u32 %v736, 4294901760
    %738 = vmatprep.subr.mxu0 %v737
    %v739 = vand.u32 %v67, 4294901760
    %v740 = vsub.f32 %v67, %v739
    %v741 = vand.u32 %v740, 4294901760
    %742 = vmatpush1.msra.mxu0 %v741
    %v743 = vand.u32 %v71, 4294901760
    %v744 = vsub.f32 %v71, %v743
    %v745 = vand.u32 %v744, 4294901760
    %746 = vmatprep.subr.mxu0 %v745
    %v747 = vand.u32 %v70, 4294901760
    %v748 = vsub.f32 %v70, %v747
    %v749 = vand.u32 %v748, 4294901760
    %750 = vmatpush1.msra.mxu0 %v749
    %v751 = vand.u32 %v74, 4294901760
    %v752 = vsub.f32 %v74, %v751
    %v753 = vand.u32 %v752, 4294901760
    %754 = vmatprep.subr.mxu0 %v753
    %v755 = vand.u32 %v73, 4294901760
    %v756 = vsub.f32 %v73, %v755
    %v757 = vand.u32 %v756, 4294901760
    %758 = vmatpush1.msra.mxu0 %v757
    %v759 = vand.u32 %v77, 4294901760
    %v760 = vsub.f32 %v77, %v759
    %v761 = vand.u32 %v760, 4294901760
    %762 = vmatprep.subr.mxu0 %v761
    %v763 = vand.u32 %v76, 4294901760
    %v764 = vsub.f32 %v76, %v763
    %v765 = vand.u32 %v764, 4294901760
    %766 = vmatpush1.msra.mxu0 %v765
    %v767 = vand.u32 %v80, 4294901760
    %v768 = vsub.f32 %v80, %v767
    %v769 = vand.u32 %v768, 4294901760
    %770 = vmatprep.subr.mxu0 %v769
    %v771 = vand.u32 %v79, 4294901760
    %v772 = vsub.f32 %v79, %v771
    %v773 = vand.u32 %v772, 4294901760
    %774 = vmatpush1.msra.mxu0 %v773
    %v775 = vand.u32 %v83, 4294901760
    %v776 = vsub.f32 %v83, %v775
    %v777 = vand.u32 %v776, 4294901760
    %778 = vmatprep.subr.mxu0 %v777
    %v779 = vand.u32 %v82, 4294901760
    %v780 = vsub.f32 %v82, %v779
    %v781 = vand.u32 %v780, 4294901760
    %782 = vmatpush1.msra.mxu0 %v781
    %v783 = vand.u32 %v86, 4294901760
    %v784 = vsub.f32 %v86, %v783
    %v785 = vand.u32 %v784, 4294901760
    %786 = vmatprep.subr.mxu0 %v785
    %v787 = vand.u32 %v85, 4294901760
    %v788 = vsub.f32 %v85, %v787
    %v789 = vand.u32 %v788, 4294901760
    %790 = vmatpush1.msra.mxu0 %v789
    %v791 = vand.u32 %v89, 4294901760
    %v792 = vsub.f32 %v89, %v791
    %v793 = vand.u32 %v792, 4294901760
    %794 = vmatprep.subr.mxu0 %v793
    %v795 = vand.u32 %v88, 4294901760
    %v796 = vsub.f32 %v88, %v795
    %v797 = vand.u32 %v796, 4294901760
    %798 = vmatpush1.msra.mxu0 %v797
    %v799 = vand.u32 %v92, 4294901760
    %v800 = vsub.f32 %v92, %v799
    %v801 = vand.u32 %v800, 4294901760
    %802 = vmatprep.subr.mxu0 %v801
    %v803 = vand.u32 %v91, 4294901760
    %v804 = vsub.f32 %v91, %v803
    %v805 = vand.u32 %v804, 4294901760
    %806 = vmatpush1.msra.mxu0 %v805
    %v807 = vand.u32 %v95, 4294901760
    %v808 = vsub.f32 %v95, %v807
    %v809 = vand.u32 %v808, 4294901760
    %810 = vmatprep.subr.mxu0 %v809
    %v811 = vand.u32 %v94, 4294901760
    %v812 = vsub.f32 %v94, %v811
    %v813 = vand.u32 %v812, 4294901760
    %814 = vmatpush1.msra.mxu0 %v813
    %v815 = vand.u32 %v98, 4294901760
    %v816 = vsub.f32 %v98, %v815
    %v817 = vand.u32 %v816, 4294901760
    %818 = vmatprep.subr.mxu0 %v817
    %v819 = vand.u32 %v97, 4294901760
    %v820 = vsub.f32 %v97, %v819
    %v821 = vand.u32 %v820, 4294901760
    %822 = vmatpush1.msra.mxu0 %v821
    %v823 = vand.u32 %v101, 4294901760
    %v824 = vsub.f32 %v101, %v823
    %v825 = vand.u32 %v824, 4294901760
    %826 = vmatprep.subr.mxu0 %v825
    %v827 = vand.u32 %v100, 4294901760
    %v828 = vsub.f32 %v100, %v827
    %v829 = vand.u32 %v828, 4294901760
    %830 = vmatpush1.msra.mxu0 %v829
    %831 = vmatprep.subr.mxu0 0.0
    %832 = vmatpush1.msra.mxu0 0.0
    %833 = vmatprep.subr.mxu0 0.0
    %834 = vmatpush1.msra.mxu0 0.0
    %835 = vmatprep.subr.mxu0 0.0
    %836 = vmatpush1.msra.mxu0 0.0
    %837 = vmatprep.subr.mxu0 0.0
    %838 = vmatpush1.msra.mxu0 0.0
    %839 = vmatprep.subr.mxu0 0.0
    %840 = vmatpush1.msra.mxu0 0.0
    %841 = vmatprep.subr.mxu0 0.0
    %842 = vmatpush1.msra.mxu0 0.0
    %843 = vmatprep.subr.mxu0 0.0
    %844 = vmatpush1.msra.mxu0 0.0
    %845 = vmatprep.subr.mxu0 0.0
    %846 = vmatpush1.msra.mxu0 0.0
    %847 = vmatprep.subr.mxu0 0.0
    %848 = vmatpush1.msra.mxu0 0.0
    %849 = vmatprep.subr.mxu0 0.0
    %850 = vmatpush1.msra.mxu0 0.0
    %851 = vmatprep.subr.mxu0 0.0
    %852 = vmatpush1.msra.mxu0 0.0
    %853 = vmatprep.subr.mxu0 0.0
    %854 = vmatpush1.msra.mxu0 0.0
    %855 = vmatprep.subr.mxu0 0.0
    %856 = vmatpush1.msra.mxu0 0.0
    %857 = vmatprep.subr.mxu0 0.0
    %858 = vmatpush1.msra.mxu0 0.0
    %859 = vmatprep.subr.mxu0 0.0
    %860 = vmatpush1.msra.mxu0 0.0
    %861 = vmatprep.subr.mxu0 0.0
    %862 = vmatpush1.msra.mxu0 0.0
    %863 = vmatprep.mubr.f32.mxu0 0.0
    %v864 = vand.u32 %v53, 4294901760
    %865 = vmatmul.mubr.f32.gmra.mrb[0].mxu0 %v864
    %v866 = vpop.f32.mrb[0].mxu0
    %v867 = vadd.f32 %v699, %v866
    %v868 = vpop.f32.mrb[0].mxu0
    %v869 = vadd.f32 %v701, %v868
    %870 = vdwg.mxu0
    %v871 = vand.u32 %v56, 4294901760
    %872 = vmatprep.subr.mxu0 %v871
    %v873 = vand.u32 %v55, 4294901760
    %874 = vmatpush1.msra.mxu0 %v873
    %v875 = vand.u32 %v59, 4294901760
    %876 = vmatprep.subr.mxu0 %v875
    %v877 = vand.u32 %v58, 4294901760
    %878 = vmatpush1.msra.mxu0 %v877
    %v879 = vand.u32 %v62, 4294901760
    %880 = vmatprep.subr.mxu0 %v879
    %v881 = vand.u32 %v61, 4294901760
    %882 = vmatpush1.msra.mxu0 %v881
    %v883 = vand.u32 %v65, 4294901760
    %884 = vmatprep.subr.mxu0 %v883
    %v885 = vand.u32 %v64, 4294901760
    %886 = vmatpush1.msra.mxu0 %v885
    %v887 = vand.u32 %v68, 4294901760
    %888 = vmatprep.subr.mxu0 %v887
    %v889 = vand.u32 %v67, 4294901760
    %890 = vmatpush1.msra.mxu0 %v889
    %v891 = vand.u32 %v71, 4294901760
    %892 = vmatprep.subr.mxu0 %v891
    %v893 = vand.u32 %v70, 4294901760
    %894 = vmatpush1.msra.mxu0 %v893
    %v895 = vand.u32 %v74, 4294901760
    %896 = vmatprep.subr.mxu0 %v895
    %v897 = vand.u32 %v73, 4294901760
    %898 = vmatpush1.msra.mxu0 %v897
    %v899 = vand.u32 %v77, 4294901760
    %900 = vmatprep.subr.mxu0 %v899
    %v901 = vand.u32 %v76, 4294901760
    %902 = vmatpush1.msra.mxu0 %v901
    %v903 = vand.u32 %v80, 4294901760
    %904 = vmatprep.subr.mxu0 %v903
    %v905 = vand.u32 %v79, 4294901760
    %906 = vmatpush1.msra.mxu0 %v905
    %v907 = vand.u32 %v83, 4294901760
    %908 = vmatprep.subr.mxu0 %v907
    %v909 = vand.u32 %v82, 4294901760
    %910 = vmatpush1.msra.mxu0 %v909
    %v911 = vand.u32 %v86, 4294901760
    %912 = vmatprep.subr.mxu0 %v911
    %v913 = vand.u32 %v85, 4294901760
    %914 = vmatpush1.msra.mxu0 %v913
    %v915 = vand.u32 %v89, 4294901760
    %916 = vmatprep.subr.mxu0 %v915
    %v917 = vand.u32 %v88, 4294901760
    %918 = vmatpush1.msra.mxu0 %v917
    %v919 = vand.u32 %v92, 4294901760
    %920 = vmatprep.subr.mxu0 %v919
    %v921 = vand.u32 %v91, 4294901760
    %922 = vmatpush1.msra.mxu0 %v921
    %v923 = vand.u32 %v95, 4294901760
    %924 = vmatprep.subr.mxu0 %v923
    %v925 = vand.u32 %v94, 4294901760
    %926 = vmatpush1.msra.mxu0 %v925
    %v927 = vand.u32 %v98, 4294901760
    %928 = vmatprep.subr.mxu0 %v927
    %v929 = vand.u32 %v97, 4294901760
    %930 = vmatpush1.msra.mxu0 %v929
    %v931 = vand.u32 %v101, 4294901760
    %932 = vmatprep.subr.mxu0 %v931
    %v933 = vand.u32 %v100, 4294901760
    %934 = vmatpush1.msra.mxu0 %v933
    %935 = vmatprep.subr.mxu0 0.0
    %936 = vmatpush1.msra.mxu0 0.0
    %937 = vmatprep.subr.mxu0 0.0
    %938 = vmatpush1.msra.mxu0 0.0
    %939 = vmatprep.subr.mxu0 0.0
    %940 = vmatpush1.msra.mxu0 0.0
    %941 = vmatprep.subr.mxu0 0.0
    %942 = vmatpush1.msra.mxu0 0.0
    %943 = vmatprep.subr.mxu0 0.0
    %944 = vmatpush1.msra.mxu0 0.0
    %945 = vmatprep.subr.mxu0 0.0
    %946 = vmatpush1.msra.mxu0 0.0
    %947 = vmatprep.subr.mxu0 0.0
    %948 = vmatpush1.msra.mxu0 0.0
    %949 = vmatprep.subr.mxu0 0.0
    %950 = vmatpush1.msra.mxu0 0.0
    %951 = vmatprep.subr.mxu0 0.0
    %952 = vmatpush1.msra.mxu0 0.0
    %953 = vmatprep.subr.mxu0 0.0
    %954 = vmatpush1.msra.mxu0 0.0
    %955 = vmatprep.subr.mxu0 0.0
    %956 = vmatpush1.msra.mxu0 0.0
    %957 = vmatprep.subr.mxu0 0.0
    %958 = vmatpush1.msra.mxu0 0.0
    %959 = vmatprep.subr.mxu0 0.0
    %960 = vmatpush1.msra.mxu0 0.0
    %961 = vmatprep.subr.mxu0 0.0
    %962 = vmatpush1.msra.mxu0 0.0
    %963 = vmatprep.subr.mxu0 0.0
    %964 = vmatpush1.msra.mxu0 0.0
    %965 = vmatprep.subr.mxu0 0.0
    %966 = vmatpush1.msra.mxu0 0.0
    %967 = vmatprep.mubr.f32.mxu0 0.0
    %v968 = vand.u32 %v53, 4294901760
    %969 = vmatmul.mubr.f32.gmra.mrb[0].mxu0 %v968
    %v970 = vpop.f32.mrb[0].mxu0
    %v971 = vadd.f32 %v867, %v970
    %v972 = vpop.f32.mrb[0].mxu0
    %v973 = vadd.f32 %v869, %v972
    %974 = vdwg.mxu0
    %975 = vmatprep.subr.mxu0 0.0
    %v976 = vand.u32 %v57, 4294901760
    %977 = vmatpush1.msra.mxu0 %v976
    %978 = vmatprep.subr.mxu0 0.0
    %v979 = vand.u32 %v60, 4294901760
    %980 = vmatpush1.msra.mxu0 %v979
    %981 = vmatprep.subr.mxu0 0.0
    %v982 = vand.u32 %v63, 4294901760
    %983 = vmatpush1.msra.mxu0 %v982
    %984 = vmatprep.subr.mxu0 0.0
    %v985 = vand.u32 %v66, 4294901760
    %986 = vmatpush1.msra.mxu0 %v985
    %987 = vmatprep.subr.mxu0 0.0
    %v988 = vand.u32 %v69, 4294901760
    %989 = vmatpush1.msra.mxu0 %v988
    %990 = vmatprep.subr.mxu0 0.0
    %v991 = vand.u32 %v72, 4294901760
    %992 = vmatpush1.msra.mxu0 %v991
    %993 = vmatprep.subr.mxu0 0.0
    %v994 = vand.u32 %v75, 4294901760
    %995 = vmatpush1.msra.mxu0 %v994
    %996 = vmatprep.subr.mxu0 0.0
    %v997 = vand.u32 %v78, 4294901760
    %998 = vmatpush1.msra.mxu0 %v997
    %999 = vmatprep.subr.mxu0 0.0
    %v1000 = vand.u32 %v81, 4294901760
    %1001 = vmatpush1.msra.mxu0 %v1000
    %1002 = vmatprep.subr.mxu0 0.0
    %v1003 = vand.u32 %v84, 4294901760
    %1004 = vmatpush1.msra.mxu0 %v1003
    %1005 = vmatprep.subr.mxu0 0.0
    %v1006 = vand.u32 %v87, 4294901760
    %1007 = vmatpush1.msra.mxu0 %v1006
    %1008 = vmatprep.subr.mxu0 0.0
    %v1009 = vand.u32 %v90, 4294901760
    %1010 = vmatpush1.msra.mxu0 %v1009
    %1011 = vmatprep.subr.mxu0 0.0
    %v1012 = vand.u32 %v93, 4294901760
    %1013 = vmatpush1.msra.mxu0 %v1012
    %1014 = vmatprep.subr.mxu0 0.0
    %v1015 = vand.u32 %v96, 4294901760
    %1016 = vmatpush1.msra.mxu0 %v1015
    %1017 = vmatprep.subr.mxu0 0.0
    %v1018 = vand.u32 %v99, 4294901760
    %1019 = vmatpush1.msra.mxu0 %v1018
    %1020 = vmatprep.subr.mxu0 0.0
    %v1021 = vand.u32 %v102, 4294901760
    %1022 = vmatpush1.msra.mxu0 %v1021
    %1023 = vmatprep.subr.mxu0 0.0
    %1024 = vmatpush1.msra.mxu0 0.0
    %1025 = vmatprep.subr.mxu0 0.0
    %1026 = vmatpush1.msra.mxu0 0.0
    %1027 = vmatprep.subr.mxu0 0.0
    %1028 = vmatpush1.msra.mxu0 0.0
    %1029 = vmatprep.subr.mxu0 0.0
    %1030 = vmatpush1.msra.mxu0 0.0
    %1031 = vmatprep.subr.mxu0 0.0
    %1032 = vmatpush1.msra.mxu0 0.0
    %1033 = vmatprep.subr.mxu0 0.0
    %1034 = vmatpush1.msra.mxu0 0.0
    %1035 = vmatprep.subr.mxu0 0.0
    %1036 = vmatpush1.msra.mxu0 0.0
    %1037 = vmatprep.subr.mxu0 0.0
    %1038 = vmatpush1.msra.mxu0 0.0
    %1039 = vmatprep.subr.mxu0 0.0
    %1040 = vmatpush1.msra.mxu0 0.0
    %1041 = vmatprep.subr.mxu0 0.0
    %1042 = vmatpush1.msra.mxu0 0.0
    %1043 = vmatprep.subr.mxu0 0.0
    %1044 = vmatpush1.msra.mxu0 0.0
    %1045 = vmatprep.subr.mxu0 0.0
    %1046 = vmatpush1.msra.mxu0 0.0
    %1047 = vmatprep.subr.mxu0 0.0
    %1048 = vmatpush1.msra.mxu0 0.0
    %1049 = vmatprep.subr.mxu0 0.0
    %1050 = vmatpush1.msra.mxu0 0.0
    %1051 = vmatprep.subr.mxu0 0.0
    %1052 = vmatpush1.msra.mxu0 0.0
    %1053 = vmatprep.subr.mxu0 0.0
    %1054 = vmatpush1.msra.mxu0 0.0
    %1055 = vmatprep.mubr.f32.mxu0 0.0
    %v1056 = vand.u32 %v53, 4294901760
    %v1057 = vsub.f32 %v53, %v1056
    %v1058 = vand.u32 %v1057, 4294901760
    %v1059 = vsub.f32 %v1057, %v1058
    %v1060 = vand.u32 %v1059, 4294901760
    %1061 = vmatmul.mubr.f32.gmra.mrb[0].mxu0 %v1060
    %v1062 = vpop.f32.mrb[0].mxu0
    %v1063 = vadd.f32 %v116, %v1062
    %v1064 = vpop.f32.mrb[0].mxu0
    %1065 = vdwg.mxu0
    %1066 = vmatprep.subr.mxu0 0.0
    %v1067 = vand.u32 %v57, 4294901760
    %v1068 = vsub.f32 %v57, %v1067
    %v1069 = vand.u32 %v1068, 4294901760
    %v1070 = vsub.f32 %v1068, %v1069
    %v1071 = vand.u32 %v1070, 4294901760
    %1072 = vmatpush1.msra.mxu0 %v1071
    %1073 = vmatprep.subr.mxu0 0.0
    %v1074 = vand.u32 %v60, 4294901760
    %v1075 = vsub.f32 %v60, %v1074
    %v1076 = vand.u32 %v1075, 4294901760
    %v1077 = vsub.f32 %v1075, %v1076
    %v1078 = vand.u32 %v1077, 4294901760
    %1079 = vmatpush1.msra.mxu0 %v1078
    %1080 = vmatprep.subr.mxu0 0.0
    %v1081 = vand.u32 %v63, 4294901760
    %v1082 = vsub.f32 %v63, %v1081
    %v1083 = vand.u32 %v1082, 4294901760
    %v1084 = vsub.f32 %v1082, %v1083
    %v1085 = vand.u32 %v1084, 4294901760
    %1086 = vmatpush1.msra.mxu0 %v1085
    %1087 = vmatprep.subr.mxu0 0.0
    %v1088 = vand.u32 %v66, 4294901760
    %v1089 = vsub.f32 %v66, %v1088
    %v1090 = vand.u32 %v1089, 4294901760
    %v1091 = vsub.f32 %v1089, %v1090
    %v1092 = vand.u32 %v1091, 4294901760
    %1093 = vmatpush1.msra.mxu0 %v1092
    %1094 = vmatprep.subr.mxu0 0.0
    %v1095 = vand.u32 %v69, 4294901760
    %v1096 = vsub.f32 %v69, %v1095
    %v1097 = vand.u32 %v1096, 4294901760
    %v1098 = vsub.f32 %v1096, %v1097
    %v1099 = vand.u32 %v1098, 4294901760
    %1100 = vmatpush1.msra.mxu0 %v1099
    %1101 = vmatprep.subr.mxu0 0.0
    %v1102 = vand.u32 %v72, 4294901760
    %v1103 = vsub.f32 %v72, %v1102
    %v1104 = vand.u32 %v1103, 4294901760
    %v1105 = vsub.f32 %v1103, %v1104
    %v1106 = vand.u32 %v1105, 4294901760
    %1107 = vmatpush1.msra.mxu0 %v1106
    %1108 = vmatprep.subr.mxu0 0.0
    %v1109 = vand.u32 %v75, 4294901760
    %v1110 = vsub.f32 %v75, %v1109
    %v1111 = vand.u32 %v1110, 4294901760
    %v1112 = vsub.f32 %v1110, %v1111
    %v1113 = vand.u32 %v1112, 4294901760
    %1114 = vmatpush1.msra.mxu0 %v1113
    %1115 = vmatprep.subr.mxu0 0.0
    %v1116 = vand.u32 %v78, 4294901760
    %v1117 = vsub.f32 %v78, %v1116
    %v1118 = vand.u32 %v1117, 4294901760
    %v1119 = vsub.f32 %v1117, %v1118
    %v1120 = vand.u32 %v1119, 4294901760
    %1121 = vmatpush1.msra.mxu0 %v1120
    %1122 = vmatprep.subr.mxu0 0.0
    %v1123 = vand.u32 %v81, 4294901760
    %v1124 = vsub.f32 %v81, %v1123
    %v1125 = vand.u32 %v1124, 4294901760
    %v1126 = vsub.f32 %v1124, %v1125
    %v1127 = vand.u32 %v1126, 4294901760
    %1128 = vmatpush1.msra.mxu0 %v1127
    %1129 = vmatprep.subr.mxu0 0.0
    %v1130 = vand.u32 %v84, 4294901760
    %v1131 = vsub.f32 %v84, %v1130
    %v1132 = vand.u32 %v1131, 4294901760
    %v1133 = vsub.f32 %v1131, %v1132
    %v1134 = vand.u32 %v1133, 4294901760
    %1135 = vmatpush1.msra.mxu0 %v1134
    %1136 = vmatprep.subr.mxu0 0.0
    %v1137 = vand.u32 %v87, 4294901760
    %v1138 = vsub.f32 %v87, %v1137
    %v1139 = vand.u32 %v1138, 4294901760
    %v1140 = vsub.f32 %v1138, %v1139
    %v1141 = vand.u32 %v1140, 4294901760
    %1142 = vmatpush1.msra.mxu0 %v1141
    %1143 = vmatprep.subr.mxu0 0.0
    %v1144 = vand.u32 %v90, 4294901760
    %v1145 = vsub.f32 %v90, %v1144
    %v1146 = vand.u32 %v1145, 4294901760
    %v1147 = vsub.f32 %v1145, %v1146
    %v1148 = vand.u32 %v1147, 4294901760
    %1149 = vmatpush1.msra.mxu0 %v1148
    %1150 = vmatprep.subr.mxu0 0.0
    %v1151 = vand.u32 %v93, 4294901760
    %v1152 = vsub.f32 %v93, %v1151
    %v1153 = vand.u32 %v1152, 4294901760
    %v1154 = vsub.f32 %v1152, %v1153
    %v1155 = vand.u32 %v1154, 4294901760
    %1156 = vmatpush1.msra.mxu0 %v1155
    %1157 = vmatprep.subr.mxu0 0.0
    %v1158 = vand.u32 %v96, 4294901760
    %v1159 = vsub.f32 %v96, %v1158
    %v1160 = vand.u32 %v1159, 4294901760
    %v1161 = vsub.f32 %v1159, %v1160
    %v1162 = vand.u32 %v1161, 4294901760
    %1163 = vmatpush1.msra.mxu0 %v1162
    %1164 = vmatprep.subr.mxu0 0.0
    %v1165 = vand.u32 %v99, 4294901760
    %v1166 = vsub.f32 %v99, %v1165
    %v1167 = vand.u32 %v1166, 4294901760
    %v1168 = vsub.f32 %v1166, %v1167
    %v1169 = vand.u32 %v1168, 4294901760
    %1170 = vmatpush1.msra.mxu0 %v1169
    %1171 = vmatprep.subr.mxu0 0.0
    %v1172 = vand.u32 %v102, 4294901760
    %v1173 = vsub.f32 %v102, %v1172
    %v1174 = vand.u32 %v1173, 4294901760
    %v1175 = vsub.f32 %v1173, %v1174
    %v1176 = vand.u32 %v1175, 4294901760
    %1177 = vmatpush1.msra.mxu0 %v1176
    %1178 = vmatprep.subr.mxu0 0.0
    %1179 = vmatpush1.msra.mxu0 0.0
    %1180 = vmatprep.subr.mxu0 0.0
    %1181 = vmatpush1.msra.mxu0 0.0
    %1182 = vmatprep.subr.mxu0 0.0
    %1183 = vmatpush1.msra.mxu0 0.0
    %1184 = vmatprep.subr.mxu0 0.0
    %1185 = vmatpush1.msra.mxu0 0.0
    %1186 = vmatprep.subr.mxu0 0.0
    %1187 = vmatpush1.msra.mxu0 0.0
    %1188 = vmatprep.subr.mxu0 0.0
    %1189 = vmatpush1.msra.mxu0 0.0
    %1190 = vmatprep.subr.mxu0 0.0
    %1191 = vmatpush1.msra.mxu0 0.0
    %1192 = vmatprep.subr.mxu0 0.0
    %1193 = vmatpush1.msra.mxu0 0.0
    %1194 = vmatprep.subr.mxu0 0.0
    %1195 = vmatpush1.msra.mxu0 0.0
    %1196 = vmatprep.subr.mxu0 0.0
    %1197 = vmatpush1.msra.mxu0 0.0
    %1198 = vmatprep.subr.mxu0 0.0
    %1199 = vmatpush1.msra.mxu0 0.0
    %1200 = vmatprep.subr.mxu0 0.0
    %1201 = vmatpush1.msra.mxu0 0.0
    %1202 = vmatprep.subr.mxu0 0.0
    %1203 = vmatpush1.msra.mxu0 0.0
    %1204 = vmatprep.subr.mxu0 0.0
    %1205 = vmatpush1.msra.mxu0 0.0
    %1206 = vmatprep.subr.mxu0 0.0
    %1207 = vmatpush1.msra.mxu0 0.0
    %1208 = vmatprep.subr.mxu0 0.0
    %1209 = vmatpush1.msra.mxu0 0.0
    %1210 = vmatprep.mubr.f32.mxu0 0.0
    %v1211 = vand.u32 %v53, 4294901760
    %1212 = vmatmul.mubr.f32.gmra.mrb[0].mxu0 %v1211
    %v1213 = vpop.f32.mrb[0].mxu0
    %v1214 = vadd.f32 %v1063, %v1213
    %v1215 = vpop.f32.mrb[0].mxu0
    %1216 = vdwg.mxu0
    %1217 = vmatprep.subr.mxu0 0.0
    %v1218 = vand.u32 %v57, 4294901760
    %v1219 = vsub.f32 %v57, %v1218
    %1220 = vmatpush1.msra.mxu0 %v1219
    %1221 = vmatprep.subr.mxu0 0.0
    %v1222 = vand.u32 %v60, 4294901760
    %v1223 = vsub.f32 %v60, %v1222
    %1224 = vmatpush1.msra.mxu0 %v1223
    %1225 = vmatprep.subr.mxu0 0.0
    %v1226 = vand.u32 %v63, 4294901760
    %v1227 = vsub.f32 %v63, %v1226
    %1228 = vmatpush1.msra.mxu0 %v1227
    %1229 = vmatprep.subr.mxu0 0.0
    %v1230 = vand.u32 %v66, 4294901760
    %v1231 = vsub.f32 %v66, %v1230
    %1232 = vmatpush1.msra.mxu0 %v1231
    %1233 = vmatprep.subr.mxu0 0.0
    %v1234 = vand.u32 %v69, 4294901760
    %v1235 = vsub.f32 %v69, %v1234
    %1236 = vmatpush1.msra.mxu0 %v1235
    %1237 = vmatprep.subr.mxu0 0.0
    %v1238 = vand.u32 %v72, 4294901760
    %v1239 = vsub.f32 %v72, %v1238
    %1240 = vmatpush1.msra.mxu0 %v1239
    %1241 = vmatprep.subr.mxu0 0.0
    %v1242 = vand.u32 %v75, 4294901760
    %v1243 = vsub.f32 %v75, %v1242
    %1244 = vmatpush1.msra.mxu0 %v1243
    %1245 = vmatprep.subr.mxu0 0.0
    %v1246 = vand.u32 %v78, 4294901760
    %v1247 = vsub.f32 %v78, %v1246
    %1248 = vmatpush1.msra.mxu0 %v1247
    %1249 = vmatprep.subr.mxu0 0.0
    %v1250 = vand.u32 %v81, 4294901760
    %v1251 = vsub.f32 %v81, %v1250
    %1252 = vmatpush1.msra.mxu0 %v1251
    %1253 = vmatprep.subr.mxu0 0.0
    %v1254 = vand.u32 %v84, 4294901760
    %v1255 = vsub.f32 %v84, %v1254
    %1256 = vmatpush1.msra.mxu0 %v1255
    %1257 = vmatprep.subr.mxu0 0.0
    %v1258 = vand.u32 %v87, 4294901760
    %v1259 = vsub.f32 %v87, %v1258
    %1260 = vmatpush1.msra.mxu0 %v1259
    %1261 = vmatprep.subr.mxu0 0.0
    %v1262 = vand.u32 %v90, 4294901760
    %v1263 = vsub.f32 %v90, %v1262
    %1264 = vmatpush1.msra.mxu0 %v1263
    %1265 = vmatprep.subr.mxu0 0.0
    %v1266 = vand.u32 %v93, 4294901760
    %v1267 = vsub.f32 %v93, %v1266
    %1268 = vmatpush1.msra.mxu0 %v1267
    %1269 = vmatprep.subr.mxu0 0.0
    %v1270 = vand.u32 %v96, 4294901760
    %v1271 = vsub.f32 %v96, %v1270
    %1272 = vmatpush1.msra.mxu0 %v1271
    %1273 = vmatprep.subr.mxu0 0.0
    %v1274 = vand.u32 %v99, 4294901760
    %v1275 = vsub.f32 %v99, %v1274
    %1276 = vmatpush1.msra.mxu0 %v1275
    %1277 = vmatprep.subr.mxu0 0.0
    %v1278 = vand.u32 %v102, 4294901760
    %v1279 = vsub.f32 %v102, %v1278
    %1280 = vmatpush1.msra.mxu0 %v1279
    %1281 = vmatprep.subr.mxu0 0.0
    %1282 = vmatpush1.msra.mxu0 0.0
    %1283 = vmatprep.subr.mxu0 0.0
    %1284 = vmatpush1.msra.mxu0 0.0
    %1285 = vmatprep.subr.mxu0 0.0
    %1286 = vmatpush1.msra.mxu0 0.0
    %1287 = vmatprep.subr.mxu0 0.0
    %1288 = vmatpush1.msra.mxu0 0.0
    %1289 = vmatprep.subr.mxu0 0.0
    %1290 = vmatpush1.msra.mxu0 0.0
    %1291 = vmatprep.subr.mxu0 0.0
    %1292 = vmatpush1.msra.mxu0 0.0
    %1293 = vmatprep.subr.mxu0 0.0
    %1294 = vmatpush1.msra.mxu0 0.0
    %1295 = vmatprep.subr.mxu0 0.0
    %1296 = vmatpush1.msra.mxu0 0.0
    %1297 = vmatprep.subr.mxu0 0.0
    %1298 = vmatpush1.msra.mxu0 0.0
    %1299 = vmatprep.subr.mxu0 0.0
    %1300 = vmatpush1.msra.mxu0 0.0
    %1301 = vmatprep.subr.mxu0 0.0
    %1302 = vmatpush1.msra.mxu0 0.0
    %1303 = vmatprep.subr.mxu0 0.0
    %1304 = vmatpush1.msra.mxu0 0.0
    %1305 = vmatprep.subr.mxu0 0.0
    %1306 = vmatpush1.msra.mxu0 0.0
    %1307 = vmatprep.subr.mxu0 0.0
    %1308 = vmatpush1.msra.mxu0 0.0
    %1309 = vmatprep.subr.mxu0 0.0
    %1310 = vmatpush1.msra.mxu0 0.0
    %1311 = vmatprep.subr.mxu0 0.0
    %1312 = vmatpush1.msra.mxu0 0.0
    %1313 = vmatprep.mubr.f32.mxu0 0.0
    %v1314 = vand.u32 %v53, 4294901760
    %v1315 = vsub.f32 %v53, %v1314
    %1316 = vmatmul.mubr.f32.gmra.mrb[0].mxu0 %v1315
    %v1317 = vpop.f32.mrb[0].mxu0
    %v1318 = vadd.f32 %v1214, %v1317
    %v1319 = vpop.f32.mrb[0].mxu0
    %1320 = vdwg.mxu0
    %1321 = vmatprep.subr.mxu0 0.0
    %v1322 = vand.u32 %v57, 4294901760
    %1323 = vmatpush1.msra.mxu0 %v1322
    %1324 = vmatprep.subr.mxu0 0.0
    %v1325 = vand.u32 %v60, 4294901760
    %1326 = vmatpush1.msra.mxu0 %v1325
    %1327 = vmatprep.subr.mxu0 0.0
    %v1328 = vand.u32 %v63, 4294901760
    %1329 = vmatpush1.msra.mxu0 %v1328
    %1330 = vmatprep.subr.mxu0 0.0
    %v1331 = vand.u32 %v66, 4294901760
    %1332 = vmatpush1.msra.mxu0 %v1331
    %1333 = vmatprep.subr.mxu0 0.0
    %v1334 = vand.u32 %v69, 4294901760
    %1335 = vmatpush1.msra.mxu0 %v1334
    %1336 = vmatprep.subr.mxu0 0.0
    %v1337 = vand.u32 %v72, 4294901760
    %1338 = vmatpush1.msra.mxu0 %v1337
    %1339 = vmatprep.subr.mxu0 0.0
    %v1340 = vand.u32 %v75, 4294901760
    %1341 = vmatpush1.msra.mxu0 %v1340
    %1342 = vmatprep.subr.mxu0 0.0
    %v1343 = vand.u32 %v78, 4294901760
    %1344 = vmatpush1.msra.mxu0 %v1343
    %1345 = vmatprep.subr.mxu0 0.0
    %v1346 = vand.u32 %v81, 4294901760
    %1347 = vmatpush1.msra.mxu0 %v1346
    %1348 = vmatprep.subr.mxu0 0.0
    %v1349 = vand.u32 %v84, 4294901760
    %1350 = vmatpush1.msra.mxu0 %v1349
    %1351 = vmatprep.subr.mxu0 0.0
    %v1352 = vand.u32 %v87, 4294901760
    %1353 = vmatpush1.msra.mxu0 %v1352
    %1354 = vmatprep.subr.mxu0 0.0
    %v1355 = vand.u32 %v90, 4294901760
    %1356 = vmatpush1.msra.mxu0 %v1355
    %1357 = vmatprep.subr.mxu0 0.0
    %v1358 = vand.u32 %v93, 4294901760
    %1359 = vmatpush1.msra.mxu0 %v1358
    %1360 = vmatprep.subr.mxu0 0.0
    %v1361 = vand.u32 %v96, 4294901760
    %1362 = vmatpush1.msra.mxu0 %v1361
    %1363 = vmatprep.subr.mxu0 0.0
    %v1364 = vand.u32 %v99, 4294901760
    %1365 = vmatpush1.msra.mxu0 %v1364
    %1366 = vmatprep.subr.mxu0 0.0
    %v1367 = vand.u32 %v102, 4294901760
    %1368 = vmatpush1.msra.mxu0 %v1367
    %1369 = vmatprep.subr.mxu0 0.0
    %1370 = vmatpush1.msra.mxu0 0.0
    %1371 = vmatprep.subr.mxu0 0.0
    %1372 = vmatpush1.msra.mxu0 0.0
    %1373 = vmatprep.subr.mxu0 0.0
    %1374 = vmatpush1.msra.mxu0 0.0
    %1375 = vmatprep.subr.mxu0 0.0
    %1376 = vmatpush1.msra.mxu0 0.0
    %1377 = vmatprep.subr.mxu0 0.0
    %1378 = vmatpush1.msra.mxu0 0.0
    %1379 = vmatprep.subr.mxu0 0.0
    %1380 = vmatpush1.msra.mxu0 0.0
    %1381 = vmatprep.subr.mxu0 0.0
    %1382 = vmatpush1.msra.mxu0 0.0
    %1383 = vmatprep.subr.mxu0 0.0
    %1384 = vmatpush1.msra.mxu0 0.0
    %1385 = vmatprep.subr.mxu0 0.0
    %1386 = vmatpush1.msra.mxu0 0.0
    %1387 = vmatprep.subr.mxu0 0.0
    %1388 = vmatpush1.msra.mxu0 0.0
    %1389 = vmatprep.subr.mxu0 0.0
    %1390 = vmatpush1.msra.mxu0 0.0
    %1391 = vmatprep.subr.mxu0 0.0
    %1392 = vmatpush1.msra.mxu0 0.0
    %1393 = vmatprep.subr.mxu0 0.0
    %1394 = vmatpush1.msra.mxu0 0.0
    %1395 = vmatprep.subr.mxu0 0.0
    %1396 = vmatpush1.msra.mxu0 0.0
    %1397 = vmatprep.subr.mxu0 0.0
    %1398 = vmatpush1.msra.mxu0 0.0
    %1399 = vmatprep.subr.mxu0 0.0
    %1400 = vmatpush1.msra.mxu0 0.0
    %1401 = vmatprep.mubr.f32.mxu0 0.0
    %v1402 = vand.u32 %v53, 4294901760
    %v1403 = vsub.f32 %v53, %v1402
    %v1404 = vand.u32 %v1403, 4294901760
    %1405 = vmatmul.mubr.f32.gmra.mrb[0].mxu0 %v1404
    %v1406 = vpop.f32.mrb[0].mxu0
    %v1407 = vadd.f32 %v1318, %v1406
    %v1408 = vpop.f32.mrb[0].mxu0
    %1409 = vdwg.mxu0
    %1410 = vmatprep.subr.mxu0 0.0
    %v1411 = vand.u32 %v57, 4294901760
    %v1412 = vsub.f32 %v57, %v1411
    %v1413 = vand.u32 %v1412, 4294901760
    %1414 = vmatpush1.msra.mxu0 %v1413
    %1415 = vmatprep.subr.mxu0 0.0
    %v1416 = vand.u32 %v60, 4294901760
    %v1417 = vsub.f32 %v60, %v1416
    %v1418 = vand.u32 %v1417, 4294901760
    %1419 = vmatpush1.msra.mxu0 %v1418
    %1420 = vmatprep.subr.mxu0 0.0
    %v1421 = vand.u32 %v63, 4294901760
    %v1422 = vsub.f32 %v63, %v1421
    %v1423 = vand.u32 %v1422, 4294901760
    %1424 = vmatpush1.msra.mxu0 %v1423
    %1425 = vmatprep.subr.mxu0 0.0
    %v1426 = vand.u32 %v66, 4294901760
    %v1427 = vsub.f32 %v66, %v1426
    %v1428 = vand.u32 %v1427, 4294901760
    %1429 = vmatpush1.msra.mxu0 %v1428
    %1430 = vmatprep.subr.mxu0 0.0
    %v1431 = vand.u32 %v69, 4294901760
    %v1432 = vsub.f32 %v69, %v1431
    %v1433 = vand.u32 %v1432, 4294901760
    %1434 = vmatpush1.msra.mxu0 %v1433
    %1435 = vmatprep.subr.mxu0 0.0
    %v1436 = vand.u32 %v72, 4294901760
    %v1437 = vsub.f32 %v72, %v1436
    %v1438 = vand.u32 %v1437, 4294901760
    %1439 = vmatpush1.msra.mxu0 %v1438
    %1440 = vmatprep.subr.mxu0 0.0
    %v1441 = vand.u32 %v75, 4294901760
    %v1442 = vsub.f32 %v75, %v1441
    %v1443 = vand.u32 %v1442, 4294901760
    %1444 = vmatpush1.msra.mxu0 %v1443
    %1445 = vmatprep.subr.mxu0 0.0
    %v1446 = vand.u32 %v78, 4294901760
    %v1447 = vsub.f32 %v78, %v1446
    %v1448 = vand.u32 %v1447, 4294901760
    %1449 = vmatpush1.msra.mxu0 %v1448
    %1450 = vmatprep.subr.mxu0 0.0
    %v1451 = vand.u32 %v81, 4294901760
    %v1452 = vsub.f32 %v81, %v1451
    %v1453 = vand.u32 %v1452, 4294901760
    %1454 = vmatpush1.msra.mxu0 %v1453
    %1455 = vmatprep.subr.mxu0 0.0
    %v1456 = vand.u32 %v84, 4294901760
    %v1457 = vsub.f32 %v84, %v1456
    %v1458 = vand.u32 %v1457, 4294901760
    %1459 = vmatpush1.msra.mxu0 %v1458
    %1460 = vmatprep.subr.mxu0 0.0
    %v1461 = vand.u32 %v87, 4294901760
    %v1462 = vsub.f32 %v87, %v1461
    %v1463 = vand.u32 %v1462, 4294901760
    %1464 = vmatpush1.msra.mxu0 %v1463
    %1465 = vmatprep.subr.mxu0 0.0
    %v1466 = vand.u32 %v90, 4294901760
    %v1467 = vsub.f32 %v90, %v1466
    %v1468 = vand.u32 %v1467, 4294901760
    %1469 = vmatpush1.msra.mxu0 %v1468
    %1470 = vmatprep.subr.mxu0 0.0
    %v1471 = vand.u32 %v93, 4294901760
    %v1472 = vsub.f32 %v93, %v1471
    %v1473 = vand.u32 %v1472, 4294901760
    %1474 = vmatpush1.msra.mxu0 %v1473
    %1475 = vmatprep.subr.mxu0 0.0
    %v1476 = vand.u32 %v96, 4294901760
    %v1477 = vsub.f32 %v96, %v1476
    %v1478 = vand.u32 %v1477, 4294901760
    %1479 = vmatpush1.msra.mxu0 %v1478
    %1480 = vmatprep.subr.mxu0 0.0
    %v1481 = vand.u32 %v99, 4294901760
    %v1482 = vsub.f32 %v99, %v1481
    %v1483 = vand.u32 %v1482, 4294901760
    %1484 = vmatpush1.msra.mxu0 %v1483
    %1485 = vmatprep.subr.mxu0 0.0
    %v1486 = vand.u32 %v102, 4294901760
    %v1487 = vsub.f32 %v102, %v1486
    %v1488 = vand.u32 %v1487, 4294901760
    %1489 = vmatpush1.msra.mxu0 %v1488
    %1490 = vmatprep.subr.mxu0 0.0
    %1491 = vmatpush1.msra.mxu0 0.0
    %1492 = vmatprep.subr.mxu0 0.0
    %1493 = vmatpush1.msra.mxu0 0.0
    %1494 = vmatprep.subr.mxu0 0.0
    %1495 = vmatpush1.msra.mxu0 0.0
    %1496 = vmatprep.subr.mxu0 0.0
    %1497 = vmatpush1.msra.mxu0 0.0
    %1498 = vmatprep.subr.mxu0 0.0
    %1499 = vmatpush1.msra.mxu0 0.0
    %1500 = vmatprep.subr.mxu0 0.0
    %1501 = vmatpush1.msra.mxu0 0.0
    %1502 = vmatprep.subr.mxu0 0.0
    %1503 = vmatpush1.msra.mxu0 0.0
    %1504 = vmatprep.subr.mxu0 0.0
    %1505 = vmatpush1.msra.mxu0 0.0
    %1506 = vmatprep.subr.mxu0 0.0
    %1507 = vmatpush1.msra.mxu0 0.0
    %1508 = vmatprep.subr.mxu0 0.0
    %1509 = vmatpush1.msra.mxu0 0.0
    %1510 = vmatprep.subr.mxu0 0.0
    %1511 = vmatpush1.msra.mxu0 0.0
    %1512 = vmatprep.subr.mxu0 0.0
    %1513 = vmatpush1.msra.mxu0 0.0
    %1514 = vmatprep.subr.mxu0 0.0
    %1515 = vmatpush1.msra.mxu0 0.0
    %1516 = vmatprep.subr.mxu0 0.0
    %1517 = vmatpush1.msra.mxu0 0.0
    %1518 = vmatprep.subr.mxu0 0.0
    %1519 = vmatpush1.msra.mxu0 0.0
    %1520 = vmatprep.subr.mxu0 0.0
    %1521 = vmatpush1.msra.mxu0 0.0
    %1522 = vmatprep.mubr.f32.mxu0 0.0
    %v1523 = vand.u32 %v53, 4294901760
    %1524 = vmatmul.mubr.f32.gmra.mrb[0].mxu0 %v1523
    %v1525 = vpop.f32.mrb[0].mxu0
    %v1526 = vadd.f32 %v1407, %v1525
    %v1527 = vpop.f32.mrb[0].mxu0
    %1528 = vdwg.mxu0
    %1529 = vmatprep.subr.mxu0 0.0
    %v1530 = vand.u32 %v57, 4294901760
    %1531 = vmatpush1.msra.mxu0 %v1530
    %1532 = vmatprep.subr.mxu0 0.0
    %v1533 = vand.u32 %v60, 4294901760
    %1534 = vmatpush1.msra.mxu0 %v1533
    %1535 = vmatprep.subr.mxu0 0.0
    %v1536 = vand.u32 %v63, 4294901760
    %1537 = vmatpush1.msra.mxu0 %v1536
    %1538 = vmatprep.subr.mxu0 0.0
    %v1539 = vand.u32 %v66, 4294901760
    %1540 = vmatpush1.msra.mxu0 %v1539
    %1541 = vmatprep.subr.mxu0 0.0
    %v1542 = vand.u32 %v69, 4294901760
    %1543 = vmatpush1.msra.mxu0 %v1542
    %1544 = vmatprep.subr.mxu0 0.0
    %v1545 = vand.u32 %v72, 4294901760
    %1546 = vmatpush1.msra.mxu0 %v1545
    %1547 = vmatprep.subr.mxu0 0.0
    %v1548 = vand.u32 %v75, 4294901760
    %1549 = vmatpush1.msra.mxu0 %v1548
    %1550 = vmatprep.subr.mxu0 0.0
    %v1551 = vand.u32 %v78, 4294901760
    %1552 = vmatpush1.msra.mxu0 %v1551
    %1553 = vmatprep.subr.mxu0 0.0
    %v1554 = vand.u32 %v81, 4294901760
    %1555 = vmatpush1.msra.mxu0 %v1554
    %1556 = vmatprep.subr.mxu0 0.0
    %v1557 = vand.u32 %v84, 4294901760
    %1558 = vmatpush1.msra.mxu0 %v1557
    %1559 = vmatprep.subr.mxu0 0.0
    %v1560 = vand.u32 %v87, 4294901760
    %1561 = vmatpush1.msra.mxu0 %v1560
    %1562 = vmatprep.subr.mxu0 0.0
    %v1563 = vand.u32 %v90, 4294901760
    %1564 = vmatpush1.msra.mxu0 %v1563
    %1565 = vmatprep.subr.mxu0 0.0
    %v1566 = vand.u32 %v93, 4294901760
    %1567 = vmatpush1.msra.mxu0 %v1566
    %1568 = vmatprep.subr.mxu0 0.0
    %v1569 = vand.u32 %v96, 4294901760
    %1570 = vmatpush1.msra.mxu0 %v1569
    %1571 = vmatprep.subr.mxu0 0.0
    %v1572 = vand.u32 %v99, 4294901760
    %1573 = vmatpush1.msra.mxu0 %v1572
    %1574 = vmatprep.subr.mxu0 0.0
    %v1575 = vand.u32 %v102, 4294901760
    %1576 = vmatpush1.msra.mxu0 %v1575
    %1577 = vmatprep.subr.mxu0 0.0
    %1578 = vmatpush1.msra.mxu0 0.0
    %1579 = vmatprep.subr.mxu0 0.0
    %1580 = vmatpush1.msra.mxu0 0.0
    %1581 = vmatprep.subr.mxu0 0.0
    %1582 = vmatpush1.msra.mxu0 0.0
    %1583 = vmatprep.subr.mxu0 0.0
    %1584 = vmatpush1.msra.mxu0 0.0
    %1585 = vmatprep.subr.mxu0 0.0
    %1586 = vmatpush1.msra.mxu0 0.0
    %1587 = vmatprep.subr.mxu0 0.0
    %1588 = vmatpush1.msra.mxu0 0.0
    %1589 = vmatprep.subr.mxu0 0.0
    %1590 = vmatpush1.msra.mxu0 0.0
    %1591 = vmatprep.subr.mxu0 0.0
    %1592 = vmatpush1.msra.mxu0 0.0
    %1593 = vmatprep.subr.mxu0 0.0
    %1594 = vmatpush1.msra.mxu0 0.0
    %1595 = vmatprep.subr.mxu0 0.0
    %1596 = vmatpush1.msra.mxu0 0.0
    %1597 = vmatprep.subr.mxu0 0.0
    %1598 = vmatpush1.msra.mxu0 0.0
    %1599 = vmatprep.subr.mxu0 0.0
    %1600 = vmatpush1.msra.mxu0 0.0
    %1601 = vmatprep.subr.mxu0 0.0
    %1602 = vmatpush1.msra.mxu0 0.0
    %1603 = vmatprep.subr.mxu0 0.0
    %1604 = vmatpush1.msra.mxu0 0.0
    %1605 = vmatprep.subr.mxu0 0.0
    %1606 = vmatpush1.msra.mxu0 0.0
    %1607 = vmatprep.subr.mxu0 0.0
    %1608 = vmatpush1.msra.mxu0 0.0
    %1609 = vmatprep.mubr.f32.mxu0 0.0
    %v1610 = vand.u32 %v53, 4294901760
    %1611 = vmatmul.mubr.f32.gmra.mrb[0].mxu0 %v1610
    %v1612 = vpop.f32.mrb[0].mxu0
    %v1613 = vadd.f32 %v1526, %v1612
    %v1614 = vpop.f32.mrb[0].mxu0
    %1615 = vdwg.mxu0
    %v1616 = vadd.f32 %v54, %v971
    %v1617 = vxor.u32 %v1616, 2147483648
    %v1618 = vmul.f32 %v1617, 1.442695
    %v1619 = vpow.pop %v1618
    %v1620 = vadd.f32 %v1619, 1.0
    %v1621 = vrcp.pop %v1620
    %v1622 = vmul.f32 1.0, %v1621
    %v1624 = vrot.slane %v54, 2
    %v1626 = vadd.f32 %v1624, %v973
    %v1627 = vxor.u32 %v1626, 2147483648
    %v1628 = vmul.f32 %v1627, 1.442695
    %v1629 = vpow.pop %v1628
    %v1630 = vadd.f32 %v1629, 1.0
    %v1631 = vrcp.pop %v1630
    %v1632 = vmul.f32 1.0, %v1631
    %v1633 = vmul.f32 %v1622, %v1613
    %v1634 = vrot.slane %v54, 4
    %v1636 = vadd.f32 %v1634, %v1633
    %v1637 = vtanh.pop %v1636
    %v1638 = vsub.f32 1.0, %v1632
    %v1639 = vmul.f32 %v1638, %v1637
    %v1640 = vmul.f32 %v1632, %v53
    %v1641 = vadd.f32 %v1639, %v1640
    %v1642 = vld [vmem:[#allocation4] sm:$0xff]
    %v1643 = vld [vmem:[#allocation4 + $0x8] sm:$0xff]
    %v1644 = vld [vmem:[#allocation4 + $0x10] sm:$0xff]
    %v1645 = vld [vmem:[#allocation4 + $0x18] sm:$0xff]
    %v1646 = vld [vmem:[#allocation4 + $0x20] sm:$0xff]
    %v1647 = vld [vmem:[#allocation4 + $0x28] sm:$0xff]
    %v1648 = vld [vmem:[#allocation4 + $0x30] sm:$0xff]
    %v1649 = vld [vmem:[#allocation4 + $0x38] sm:$0xff]
    %v1650 = vld [vmem:[#allocation4 + $0x40] sm:$0xff]
    %v1651 = vld [vmem:[#allocation4 + $0x48] sm:$0xff]
    %v1652 = vld [vmem:[#allocation4 + $0x50] sm:$0xff]
    %v1653 = vld [vmem:[#allocation4 + $0x58] sm:$0xff]
    %v1654 = vld [vmem:[#allocation4 + $0x60] sm:$0xff]
    %v1655 = vld [vmem:[#allocation4 + $0x68] sm:$0xff]
    %v1656 = vld [vmem:[#allocation4 + $0x70] sm:$0xff]
    %v1657 = vld [vmem:[#allocation4 + $0x78] sm:$0xff]
    %v1658 = vld [vmem:[%s5] sm:$0x1]
    %v1660 = vlaneseq
    %v1661 = vshrl.u32 %v1660, 7
    %v1662 = vsub.s32 0, %v1661
    %v1663 = vrot.slane %v1658, %v1662
    %1665 = vmatprep.subr.mxu0 0.0
    %v1666 = vand.u32 %v1642, 4294901760
    %1667 = vmatpush1.msra.mxu0 %v1666
    %1668 = vmatprep.subr.mxu0 0.0
    %v1669 = vand.u32 %v1643, 4294901760
    %1670 = vmatpush1.msra.mxu0 %v1669
    %1671 = vmatprep.subr.mxu0 0.0
    %v1672 = vand.u32 %v1644, 4294901760
    %1673 = vmatpush1.msra.mxu0 %v1672
    %1674 = vmatprep.subr.mxu0 0.0
    %v1675 = vand.u32 %v1645, 4294901760
    %1676 = vmatpush1.msra.mxu0 %v1675
    %1677 = vmatprep.subr.mxu0 0.0
    %v1678 = vand.u32 %v1646, 4294901760
    %1679 = vmatpush1.msra.mxu0 %v1678
    %1680 = vmatprep.subr.mxu0 0.0
    %v1681 = vand.u32 %v1647, 4294901760
    %1682 = vmatpush1.msra.mxu0 %v1681
    %1683 = vmatprep.subr.mxu0 0.0
    %v1684 = vand.u32 %v1648, 4294901760
    %1685 = vmatpush1.msra.mxu0 %v1684
    %1686 = vmatprep.subr.mxu0 0.0
    %v1687 = vand.u32 %v1649, 4294901760
    %1688 = vmatpush1.msra.mxu0 %v1687
    %1689 = vmatprep.subr.mxu0 0.0
    %v1690 = vand.u32 %v1650, 4294901760
    %1691 = vmatpush1.msra.mxu0 %v1690
    %1692 = vmatprep.subr.mxu0 0.0
    %v1693 = vand.u32 %v1651, 4294901760
    %1694 = vmatpush1.msra.mxu0 %v1693
    %1695 = vmatprep.subr.mxu0 0.0
    %v1696 = vand.u32 %v1652, 4294901760
    %1697 = vmatpush1.msra.mxu0 %v1696
    %1698 = vmatprep.subr.mxu0 0.0
    %v1699 = vand.u32 %v1653, 4294901760
    %1700 = vmatpush1.msra.mxu0 %v1699
    %1701 = vmatprep.subr.mxu0 0.0
    %v1702 = vand.u32 %v1654, 4294901760
    %1703 = vmatpush1.msra.mxu0 %v1702
    %1704 = vmatprep.subr.mxu0 0.0
    %v1705 = vand.u32 %v1655, 4294901760
    %1706 = vmatpush1.msra.mxu0 %v1705
    %1707 = vmatprep.subr.mxu0 0.0
    %v1708 = vand.u32 %v1656, 4294901760
    %1709 = vmatpush1.msra.mxu0 %v1708
    %1710 = vmatprep.subr.mxu0 0.0
    %v1711 = vand.u32 %v1657, 4294901760
    %1712 = vmatpush1.msra.mxu0 %v1711
    %1713 = vmatprep.subr.mxu0 0.0
    %1714 = vmatpush1.msra.mxu0 0.0
    %1715 = vmatprep.subr.mxu0 0.0
    %1716 = vmatpush1.msra.mxu0 0.0
    %1717 = vmatprep.subr.mxu0 0.0
    %1718 = vmatpush1.msra.mxu0 0.0
    %1719 = vmatprep.subr.mxu0 0.0
    %1720 = vmatpush1.msra.mxu0 0.0
    %1721 = vmatprep.subr.mxu0 0.0
    %1722 = vmatpush1.msra.mxu0 0.0
    %1723 = vmatprep.subr.mxu0 0.0
    %1724 = vmatpush1.msra.mxu0 0.0
    %1725 = vmatprep.subr.mxu0 0.0
    %1726 = vmatpush1.msra.mxu0 0.0
    %1727 = vmatprep.subr.mxu0 0.0
    %1728 = vmatpush1.msra.mxu0 0.0
    %1729 = vmatprep.subr.mxu0 0.0
    %1730 = vmatpush1.msra.mxu0 0.0
    %1731 = vmatprep.subr.mxu0 0.0
    %1732 = vmatpush1.msra.mxu0 0.0
    %1733 = vmatprep.subr.mxu0 0.0
    %1734 = vmatpush1.msra.mxu0 0.0
    %1735 = vmatprep.subr.mxu0 0.0
    %1736 = vmatpush1.msra.mxu0 0.0
    %1737 = vmatprep.subr.mxu0 0.0
    %1738 = vmatpush1.msra.mxu0 0.0
    %1739 = vmatprep.subr.mxu0 0.0
    %1740 = vmatpush1.msra.mxu0 0.0
    %1741 = vmatprep.subr.mxu0 0.0
    %1742 = vmatpush1.msra.mxu0 0.0
    %1743 = vmatprep.subr.mxu0 0.0
    %1744 = vmatpush1.msra.mxu0 0.0
    %1745 = vmatprep.mubr.f32.mxu0 0.0
    %v1746 = vand.u32 %v1641, 4294901760
    %v1747 = vsub.f32 %v1641, %v1746
    %v1748 = vand.u32 %v1747, 4294901760
    %v1749 = vsub.f32 %v1747, %v1748
    %v1750 = vand.u32 %v1749, 4294901760
    %1751 = vmatmul.mubr.f32.gmra.mrb[0].mxu0 %v1750
    %v1752 = vpop.f32.mrb[0].mxu0
    %v1753 = vadd.f32 %v1663, %v1752
    %v1754 = vpop.f32.mrb[0].mxu0
    %1755 = vdwg.mxu0
    %1756 = vmatprep.subr.mxu0 0.0
    %v1757 = vand.u32 %v1642, 4294901760
    %v1758 = vsub.f32 %v1642, %v1757
    %v1759 = vand.u32 %v1758, 4294901760
    %v1760 = vsub.f32 %v1758, %v1759
    %v1761 = vand.u32 %v1760, 4294901760
    %1762 = vmatpush1.msra.mxu0 %v1761
    %1763 = vmatprep.subr.mxu0 0.0
    %v1764 = vand.u32 %v1643, 4294901760
    %v1765 = vsub.f32 %v1643, %v1764
    %v1766 = vand.u32 %v1765, 4294901760
    %v1767 = vsub.f32 %v1765, %v1766
    %v1768 = vand.u32 %v1767, 4294901760
    %1769 = vmatpush1.msra.mxu0 %v1768
    %1770 = vmatprep.subr.mxu0 0.0
    %v1771 = vand.u32 %v1644, 4294901760
    %v1772 = vsub.f32 %v1644, %v1771
    %v1773 = vand.u32 %v1772, 4294901760
    %v1774 = vsub.f32 %v1772, %v1773
    %v1775 = vand.u32 %v1774, 4294901760
    %1776 = vmatpush1.msra.mxu0 %v1775
    %1777 = vmatprep.subr.mxu0 0.0
    %v1778 = vand.u32 %v1645, 4294901760
    %v1779 = vsub.f32 %v1645, %v1778
    %v1780 = vand.u32 %v1779, 4294901760
    %v1781 = vsub.f32 %v1779, %v1780
    %v1782 = vand.u32 %v1781, 4294901760
    %1783 = vmatpush1.msra.mxu0 %v1782
    %1784 = vmatprep.subr.mxu0 0.0
    %v1785 = vand.u32 %v1646, 4294901760
    %v1786 = vsub.f32 %v1646, %v1785
    %v1787 = vand.u32 %v1786, 4294901760
    %v1788 = vsub.f32 %v1786, %v1787
    %v1789 = vand.u32 %v1788, 4294901760
    %1790 = vmatpush1.msra.mxu0 %v1789
    %1791 = vmatprep.subr.mxu0 0.0
    %v1792 = vand.u32 %v1647, 4294901760
    %v1793 = vsub.f32 %v1647, %v1792
    %v1794 = vand.u32 %v1793, 4294901760
    %v1795 = vsub.f32 %v1793, %v1794
    %v1796 = vand.u32 %v1795, 4294901760
    %1797 = vmatpush1.msra.mxu0 %v1796
    %1798 = vmatprep.subr.mxu0 0.0
    %v1799 = vand.u32 %v1648, 4294901760
    %v1800 = vsub.f32 %v1648, %v1799
    %v1801 = vand.u32 %v1800, 4294901760
    %v1802 = vsub.f32 %v1800, %v1801
    %v1803 = vand.u32 %v1802, 4294901760
    %1804 = vmatpush1.msra.mxu0 %v1803
    %1805 = vmatprep.subr.mxu0 0.0
    %v1806 = vand.u32 %v1649, 4294901760
    %v1807 = vsub.f32 %v1649, %v1806
    %v1808 = vand.u32 %v1807, 4294901760
    %v1809 = vsub.f32 %v1807, %v1808
    %v1810 = vand.u32 %v1809, 4294901760
    %1811 = vmatpush1.msra.mxu0 %v1810
    %1812 = vmatprep.subr.mxu0 0.0
    %v1813 = vand.u32 %v1650, 4294901760
    %v1814 = vsub.f32 %v1650, %v1813
    %v1815 = vand.u32 %v1814, 4294901760
    %v1816 = vsub.f32 %v1814, %v1815
    %v1817 = vand.u32 %v1816, 4294901760
    %1818 = vmatpush1.msra.mxu0 %v1817
    %1819 = vmatprep.subr.mxu0 0.0
    %v1820 = vand.u32 %v1651, 4294901760
    %v1821 = vsub.f32 %v1651, %v1820
    %v1822 = vand.u32 %v1821, 4294901760
    %v1823 = vsub.f32 %v1821, %v1822
    %v1824 = vand.u32 %v1823, 4294901760
    %1825 = vmatpush1.msra.mxu0 %v1824
    %1826 = vmatprep.subr.mxu0 0.0
    %v1827 = vand.u32 %v1652, 4294901760
    %v1828 = vsub.f32 %v1652, %v1827
    %v1829 = vand.u32 %v1828, 4294901760
    %v1830 = vsub.f32 %v1828, %v1829
    %v1831 = vand.u32 %v1830, 4294901760
    %1832 = vmatpush1.msra.mxu0 %v1831
    %1833 = vmatprep.subr.mxu0 0.0
    %v1834 = vand.u32 %v1653, 4294901760
    %v1835 = vsub.f32 %v1653, %v1834
    %v1836 = vand.u32 %v1835, 4294901760
    %v1837 = vsub.f32 %v1835, %v1836
    %v1838 = vand.u32 %v1837, 4294901760
    %1839 = vmatpush1.msra.mxu0 %v1838
    %1840 = vmatprep.subr.mxu0 0.0
    %v1841 = vand.u32 %v1654, 4294901760
    %v1842 = vsub.f32 %v1654, %v1841
    %v1843 = vand.u32 %v1842, 4294901760
    %v1844 = vsub.f32 %v1842, %v1843
    %v1845 = vand.u32 %v1844, 4294901760
    %1846 = vmatpush1.msra.mxu0 %v1845
    %1847 = vmatprep.subr.mxu0 0.0
    %v1848 = vand.u32 %v1655, 4294901760
    %v1849 = vsub.f32 %v1655, %v1848
    %v1850 = vand.u32 %v1849, 4294901760
    %v1851 = vsub.f32 %v1849, %v1850
    %v1852 = vand.u32 %v1851, 4294901760
    %1853 = vmatpush1.msra.mxu0 %v1852
    %1854 = vmatprep.subr.mxu0 0.0
    %v1855 = vand.u32 %v1656, 4294901760
    %v1856 = vsub.f32 %v1656, %v1855
    %v1857 = vand.u32 %v1856, 4294901760
    %v1858 = vsub.f32 %v1856, %v1857
    %v1859 = vand.u32 %v1858, 4294901760
    %1860 = vmatpush1.msra.mxu0 %v1859
    %1861 = vmatprep.subr.mxu0 0.0
    %v1862 = vand.u32 %v1657, 4294901760
    %v1863 = vsub.f32 %v1657, %v1862
    %v1864 = vand.u32 %v1863, 4294901760
    %v1865 = vsub.f32 %v1863, %v1864
    %v1866 = vand.u32 %v1865, 4294901760
    %1867 = vmatpush1.msra.mxu0 %v1866
    %1868 = vmatprep.subr.mxu0 0.0
    %1869 = vmatpush1.msra.mxu0 0.0
    %1870 = vmatprep.subr.mxu0 0.0
    %1871 = vmatpush1.msra.mxu0 0.0
    %1872 = vmatprep.subr.mxu0 0.0
    %1873 = vmatpush1.msra.mxu0 0.0
    %1874 = vmatprep.subr.mxu0 0.0
    %1875 = vmatpush1.msra.mxu0 0.0
    %1876 = vmatprep.subr.mxu0 0.0
    %1877 = vmatpush1.msra.mxu0 0.0
    %1878 = vmatprep.subr.mxu0 0.0
    %1879 = vmatpush1.msra.mxu0 0.0
    %1880 = vmatprep.subr.mxu0 0.0
    %1881 = vmatpush1.msra.mxu0 0.0
    %1882 = vmatprep.subr.mxu0 0.0
    %1883 = vmatpush1.msra.mxu0 0.0
    %1884 = vmatprep.subr.mxu0 0.0
    %1885 = vmatpush1.msra.mxu0 0.0
    %1886 = vmatprep.subr.mxu0 0.0
    %1887 = vmatpush1.msra.mxu0 0.0
    %1888 = vmatprep.subr.mxu0 0.0
    %1889 = vmatpush1.msra.mxu0 0.0
    %1890 = vmatprep.subr.mxu0 0.0
    %1891 = vmatpush1.msra.mxu0 0.0
    %1892 = vmatprep.subr.mxu0 0.0
    %1893 = vmatpush1.msra.mxu0 0.0
    %1894 = vmatprep.subr.mxu0 0.0
    %1895 = vmatpush1.msra.mxu0 0.0
    %1896 = vmatprep.subr.mxu0 0.0
    %1897 = vmatpush1.msra.mxu0 0.0
    %1898 = vmatprep.subr.mxu0 0.0
    %1899 = vmatpush1.msra.mxu0 0.0
    %1900 = vmatprep.mubr.f32.mxu0 0.0
    %v1901 = vand.u32 %v1641, 4294901760
    %1902 = vmatmul.mubr.f32.gmra.mrb[0].mxu0 %v1901
    %v1903 = vpop.f32.mrb[0].mxu0
    %v1904 = vadd.f32 %v1753, %v1903
    %v1905 = vpop.f32.mrb[0].mxu0
    %1906 = vdwg.mxu0
    %1907 = vmatprep.subr.mxu0 0.0
    %v1908 = vand.u32 %v1642, 4294901760
    %v1909 = vsub.f32 %v1642, %v1908
    %1910 = vmatpush1.msra.mxu0 %v1909
    %1911 = vmatprep.subr.mxu0 0.0
    %v1912 = vand.u32 %v1643, 4294901760
    %v1913 = vsub.f32 %v1643, %v1912
    %1914 = vmatpush1.msra.mxu0 %v1913
    %1915 = vmatprep.subr.mxu0 0.0
    %v1916 = vand.u32 %v1644, 4294901760
    %v1917 = vsub.f32 %v1644, %v1916
    %1918 = vmatpush1.msra.mxu0 %v1917
    %1919 = vmatprep.subr.mxu0 0.0
    %v1920 = vand.u32 %v1645, 4294901760
    %v1921 = vsub.f32 %v1645, %v1920
    %1922 = vmatpush1.msra.mxu0 %v1921
    %1923 = vmatprep.subr.mxu0 0.0
    %v1924 = vand.u32 %v1646, 4294901760
    %v1925 = vsub.f32 %v1646, %v1924
    %1926 = vmatpush1.msra.mxu0 %v1925
    %1927 = vmatprep.subr.mxu0 0.0
    %v1928 = vand.u32 %v1647, 4294901760
    %v1929 = vsub.f32 %v1647, %v1928
    %1930 = vmatpush1.msra.mxu0 %v1929
    %1931 = vmatprep.subr.mxu0 0.0
    %v1932 = vand.u32 %v1648, 4294901760
    %v1933 = vsub.f32 %v1648, %v1932
    %1934 = vmatpush1.msra.mxu0 %v1933
    %1935 = vmatprep.subr.mxu0 0.0
    %v1936 = vand.u32 %v1649, 4294901760
    %v1937 = vsub.f32 %v1649, %v1936
    %1938 = vmatpush1.msra.mxu0 %v1937
    %1939 = vmatprep.subr.mxu0 0.0
    %v1940 = vand.u32 %v1650, 4294901760
    %v1941 = vsub.f32 %v1650, %v1940
    %1942 = vmatpush1.msra.mxu0 %v1941
    %1943 = vmatprep.subr.mxu0 0.0
    %v1944 = vand.u32 %v1651, 4294901760
    %v1945 = vsub.f32 %v1651, %v1944
    %1946 = vmatpush1.msra.mxu0 %v1945
    %1947 = vmatprep.subr.mxu0 0.0
    %v1948 = vand.u32 %v1652, 4294901760
    %v1949 = vsub.f32 %v1652, %v1948
    %1950 = vmatpush1.msra.mxu0 %v1949
    %1951 = vmatprep.subr.mxu0 0.0
    %v1952 = vand.u32 %v1653, 4294901760
    %v1953 = vsub.f32 %v1653, %v1952
    %1954 = vmatpush1.msra.mxu0 %v1953
    %1955 = vmatprep.subr.mxu0 0.0
    %v1956 = vand.u32 %v1654, 4294901760
    %v1957 = vsub.f32 %v1654, %v1956
    %1958 = vmatpush1.msra.mxu0 %v1957
    %1959 = vmatprep.subr.mxu0 0.0
    %v1960 = vand.u32 %v1655, 4294901760
    %v1961 = vsub.f32 %v1655, %v1960
    %1962 = vmatpush1.msra.mxu0 %v1961
    %1963 = vmatprep.subr.mxu0 0.0
    %v1964 = vand.u32 %v1656, 4294901760
    %v1965 = vsub.f32 %v1656, %v1964
    %1966 = vmatpush1.msra.mxu0 %v1965
    %1967 = vmatprep.subr.mxu0 0.0
    %v1968 = vand.u32 %v1657, 4294901760
    %v1969 = vsub.f32 %v1657, %v1968
    %1970 = vmatpush1.msra.mxu0 %v1969
    %1971 = vmatprep.subr.mxu0 0.0
    %1972 = vmatpush1.msra.mxu0 0.0
    %1973 = vmatprep.subr.mxu0 0.0
    %1974 = vmatpush1.msra.mxu0 0.0
    %1975 = vmatprep.subr.mxu0 0.0
    %1976 = vmatpush1.msra.mxu0 0.0
    %1977 = vmatprep.subr.mxu0 0.0
    %1978 = vmatpush1.msra.mxu0 0.0
    %1979 = vmatprep.subr.mxu0 0.0
    %1980 = vmatpush1.msra.mxu0 0.0
    %1981 = vmatprep.subr.mxu0 0.0
    %1982 = vmatpush1.msra.mxu0 0.0
    %1983 = vmatprep.subr.mxu0 0.0
    %1984 = vmatpush1.msra.mxu0 0.0
    %1985 = vmatprep.subr.mxu0 0.0
    %1986 = vmatpush1.msra.mxu0 0.0
    %1987 = vmatprep.subr.mxu0 0.0
    %1988 = vmatpush1.msra.mxu0 0.0
    %1989 = vmatprep.subr.mxu0 0.0
    %1990 = vmatpush1.msra.mxu0 0.0
    %1991 = vmatprep.subr.mxu0 0.0
    %1992 = vmatpush1.msra.mxu0 0.0
    %1993 = vmatprep.subr.mxu0 0.0
    %1994 = vmatpush1.msra.mxu0 0.0
    %1995 = vmatprep.subr.mxu0 0.0
    %1996 = vmatpush1.msra.mxu0 0.0
    %1997 = vmatprep.subr.mxu0 0.0
    %1998 = vmatpush1.msra.mxu0 0.0
    %1999 = vmatprep.subr.mxu0 0.0
    %2000 = vmatpush1.msra.mxu0 0.0
    %2001 = vmatprep.subr.mxu0 0.0
    %2002 = vmatpush1.msra.mxu0 0.0
    %2003 = vmatprep.mubr.f32.mxu0 0.0
    %v2004 = vand.u32 %v1641, 4294901760
    %v2005 = vsub.f32 %v1641, %v2004
    %2006 = vmatmul.mubr.f32.gmra.mrb[0].mxu0 %v2005
    %v2007 = vpop.f32.mrb[0].mxu0
    %v2008 = vadd.f32 %v1904, %v2007
    %v2009 = vpop.f32.mrb[0].mxu0
    %2010 = vdwg.mxu0
    %2011 = vmatprep.subr.mxu0 0.0
    %v2012 = vand.u32 %v1642, 4294901760
    %2013 = vmatpush1.msra.mxu0 %v2012
    %2014 = vmatprep.subr.mxu0 0.0
    %v2015 = vand.u32 %v1643, 4294901760
    %2016 = vmatpush1.msra.mxu0 %v2015
    %2017 = vmatprep.subr.mxu0 0.0
    %v2018 = vand.u32 %v1644, 4294901760
    %2019 = vmatpush1.msra.mxu0 %v2018
    %2020 = vmatprep.subr.mxu0 0.0
    %v2021 = vand.u32 %v1645, 4294901760
    %2022 = vmatpush1.msra.mxu0 %v2021
    %2023 = vmatprep.subr.mxu0 0.0
    %v2024 = vand.u32 %v1646, 4294901760
    %2025 = vmatpush1.msra.mxu0 %v2024
    %2026 = vmatprep.subr.mxu0 0.0
    %v2027 = vand.u32 %v1647, 4294901760
    %2028 = vmatpush1.msra.mxu0 %v2027
    %2029 = vmatprep.subr.mxu0 0.0
    %v2030 = vand.u32 %v1648, 4294901760
    %2031 = vmatpush1.msra.mxu0 %v2030
    %2032 = vmatprep.subr.mxu0 0.0
    %v2033 = vand.u32 %v1649, 4294901760
    %2034 = vmatpush1.msra.mxu0 %v2033
    %2035 = vmatprep.subr.mxu0 0.0
    %v2036 = vand.u32 %v1650, 4294901760
    %2037 = vmatpush1.msra.mxu0 %v2036
    %2038 = vmatprep.subr.mxu0 0.0
    %v2039 = vand.u32 %v1651, 4294901760
    %2040 = vmatpush1.msra.mxu0 %v2039
    %2041 = vmatprep.subr.mxu0 0.0
    %v2042 = vand.u32 %v1652, 4294901760
    %2043 = vmatpush1.msra.mxu0 %v2042
    %2044 = vmatprep.subr.mxu0 0.0
    %v2045 = vand.u32 %v1653, 4294901760
    %2046 = vmatpush1.msra.mxu0 %v2045
    %2047 = vmatprep.subr.mxu0 0.0
    %v2048 = vand.u32 %v1654, 4294901760
    %2049 = vmatpush1.msra.mxu0 %v2048
    %2050 = vmatprep.subr.mxu0 0.0
    %v2051 = vand.u32 %v1655, 4294901760
    %2052 = vmatpush1.msra.mxu0 %v2051
    %2053 = vmatprep.subr.mxu0 0.0
    %v2054 = vand.u32 %v1656, 4294901760
    %2055 = vmatpush1.msra.mxu0 %v2054
    %2056 = vmatprep.subr.mxu0 0.0
    %v2057 = vand.u32 %v1657, 4294901760
    %2058 = vmatpush1.msra.mxu0 %v2057
    %2059 = vmatprep.subr.mxu0 0.0
    %2060 = vmatpush1.msra.mxu0 0.0
    %2061 = vmatprep.subr.mxu0 0.0
    %2062 = vmatpush1.msra.mxu0 0.0
    %2063 = vmatprep.subr.mxu0 0.0
    %2064 = vmatpush1.msra.mxu0 0.0
    %2065 = vmatprep.subr.mxu0 0.0
    %2066 = vmatpush1.msra.mxu0 0.0
    %2067 = vmatprep.subr.mxu0 0.0
    %2068 = vmatpush1.msra.mxu0 0.0
    %2069 = vmatprep.subr.mxu0 0.0
    %2070 = vmatpush1.msra.mxu0 0.0
    %2071 = vmatprep.subr.mxu0 0.0
    %2072 = vmatpush1.msra.mxu0 0.0
    %2073 = vmatprep.subr.mxu0 0.0
    %2074 = vmatpush1.msra.mxu0 0.0
    %2075 = vmatprep.subr.mxu0 0.0
    %2076 = vmatpush1.msra.mxu0 0.0
    %2077 = vmatprep.subr.mxu0 0.0
    %2078 = vmatpush1.msra.mxu0 0.0
    %2079 = vmatprep.subr.mxu0 0.0
    %2080 = vmatpush1.msra.mxu0 0.0
    %2081 = vmatprep.subr.mxu0 0.0
    %2082 = vmatpush1.msra.mxu0 0.0
    %2083 = vmatprep.subr.mxu0 0.0
    %2084 = vmatpush1.msra.mxu0 0.0
    %2085 = vmatprep.subr.mxu0 0.0
    %2086 = vmatpush1.msra.mxu0 0.0
    %2087 = vmatprep.subr.mxu0 0.0
    %2088 = vmatpush1.msra.mxu0 0.0
    %2089 = vmatprep.subr.mxu0 0.0
    %2090 = vmatpush1.msra.mxu0 0.0
    %2091 = vmatprep.mubr.f32.mxu0 0.0
    %v2092 = vand.u32 %v1641, 4294901760
    %v2093 = vsub.f32 %v1641, %v2092
    %v2094 = vand.u32 %v2093, 4294901760
    %2095 = vmatmul.mubr.f32.gmra.mrb[0].mxu0 %v2094
    %v2096 = vpop.f32.mrb[0].mxu0
    %v2097 = vadd.f32 %v2008, %v2096
    %v2098 = vpop.f32.mrb[0].mxu0
    %2099 = vdwg.mxu0
    %2100 = vmatprep.subr.mxu0 0.0
    %v2101 = vand.u32 %v1642, 4294901760
    %v2102 = vsub.f32 %v1642, %v2101
    %v2103 = vand.u32 %v2102, 4294901760
    %2104 = vmatpush1.msra.mxu0 %v2103
    %2105 = vmatprep.subr.mxu0 0.0
    %v2106 = vand.u32 %v1643, 4294901760
    %v2107 = vsub.f32 %v1643, %v2106
    %v2108 = vand.u32 %v2107, 4294901760
    %2109 = vmatpush1.msra.mxu0 %v2108
    %2110 = vmatprep.subr.mxu0 0.0
    %v2111 = vand.u32 %v1644, 4294901760
    %v2112 = vsub.f32 %v1644, %v2111
    %v2113 = vand.u32 %v2112, 4294901760
    %2114 = vmatpush1.msra.mxu0 %v2113
    %2115 = vmatprep.subr.mxu0 0.0
    %v2116 = vand.u32 %v1645, 4294901760
    %v2117 = vsub.f32 %v1645, %v2116
    %v2118 = vand.u32 %v2117, 4294901760
    %2119 = vmatpush1.msra.mxu0 %v2118
    %2120 = vmatprep.subr.mxu0 0.0
    %v2121 = vand.u32 %v1646, 4294901760
    %v2122 = vsub.f32 %v1646, %v2121
    %v2123 = vand.u32 %v2122, 4294901760
    %2124 = vmatpush1.msra.mxu0 %v2123
    %2125 = vmatprep.subr.mxu0 0.0
    %v2126 = vand.u32 %v1647, 4294901760
    %v2127 = vsub.f32 %v1647, %v2126
    %v2128 = vand.u32 %v2127, 4294901760
    %2129 = vmatpush1.msra.mxu0 %v2128
    %2130 = vmatprep.subr.mxu0 0.0
    %v2131 = vand.u32 %v1648, 4294901760
    %v2132 = vsub.f32 %v1648, %v2131
    %v2133 = vand.u32 %v2132, 4294901760
    %2134 = vmatpush1.msra.mxu0 %v2133
    %2135 = vmatprep.subr.mxu0 0.0
    %v2136 = vand.u32 %v1649, 4294901760
    %v2137 = vsub.f32 %v1649, %v2136
    %v2138 = vand.u32 %v2137, 4294901760
    %2139 = vmatpush1.msra.mxu0 %v2138
    %2140 = vmatprep.subr.mxu0 0.0
    %v2141 = vand.u32 %v1650, 4294901760
    %v2142 = vsub.f32 %v1650, %v2141
    %v2143 = vand.u32 %v2142, 4294901760
    %2144 = vmatpush1.msra.mxu0 %v2143
    %2145 = vmatprep.subr.mxu0 0.0
    %v2146 = vand.u32 %v1651, 4294901760
    %v2147 = vsub.f32 %v1651, %v2146
    %v2148 = vand.u32 %v2147, 4294901760
    %2149 = vmatpush1.msra.mxu0 %v2148
    %2150 = vmatprep.subr.mxu0 0.0
    %v2151 = vand.u32 %v1652, 4294901760
    %v2152 = vsub.f32 %v1652, %v2151
    %v2153 = vand.u32 %v2152, 4294901760
    %2154 = vmatpush1.msra.mxu0 %v2153
    %2155 = vmatprep.subr.mxu0 0.0
    %v2156 = vand.u32 %v1653, 4294901760
    %v2157 = vsub.f32 %v1653, %v2156
    %v2158 = vand.u32 %v2157, 4294901760
    %2159 = vmatpush1.msra.mxu0 %v2158
    %2160 = vmatprep.subr.mxu0 0.0
    %v2161 = vand.u32 %v1654, 4294901760
    %v2162 = vsub.f32 %v1654, %v2161
    %v2163 = vand.u32 %v2162, 4294901760
    %2164 = vmatpush1.msra.mxu0 %v2163
    %2165 = vmatprep.subr.mxu0 0.0
    %v2166 = vand.u32 %v1655, 4294901760
    %v2167 = vsub.f32 %v1655, %v2166
    %v2168 = vand.u32 %v2167, 4294901760
    %2169 = vmatpush1.msra.mxu0 %v2168
    %2170 = vmatprep.subr.mxu0 0.0
    %v2171 = vand.u32 %v1656, 4294901760
    %v2172 = vsub.f32 %v1656, %v2171
    %v2173 = vand.u32 %v2172, 4294901760
    %2174 = vmatpush1.msra.mxu0 %v2173
    %2175 = vmatprep.subr.mxu0 0.0
    %v2176 = vand.u32 %v1657, 4294901760
    %v2177 = vsub.f32 %v1657, %v2176
    %v2178 = vand.u32 %v2177, 4294901760
    %2179 = vmatpush1.msra.mxu0 %v2178
    %2180 = vmatprep.subr.mxu0 0.0
    %2181 = vmatpush1.msra.mxu0 0.0
    %2182 = vmatprep.subr.mxu0 0.0
    %2183 = vmatpush1.msra.mxu0 0.0
    %2184 = vmatprep.subr.mxu0 0.0
    %2185 = vmatpush1.msra.mxu0 0.0
    %2186 = vmatprep.subr.mxu0 0.0
    %2187 = vmatpush1.msra.mxu0 0.0
    %2188 = vmatprep.subr.mxu0 0.0
    %2189 = vmatpush1.msra.mxu0 0.0
    %2190 = vmatprep.subr.mxu0 0.0
    %2191 = vmatpush1.msra.mxu0 0.0
    %2192 = vmatprep.subr.mxu0 0.0
    %2193 = vmatpush1.msra.mxu0 0.0
    %2194 = vmatprep.subr.mxu0 0.0
    %2195 = vmatpush1.msra.mxu0 0.0
    %2196 = vmatprep.subr.mxu0 0.0
    %2197 = vmatpush1.msra.mxu0 0.0
    %2198 = vmatprep.subr.mxu0 0.0
    %2199 = vmatpush1.msra.mxu0 0.0
    %2200 = vmatprep.subr.mxu0 0.0
    %2201 = vmatpush1.msra.mxu0 0.0
    %2202 = vmatprep.subr.mxu0 0.0
    %2203 = vmatpush1.msra.mxu0 0.0
    %2204 = vmatprep.subr.mxu0 0.0
    %2205 = vmatpush1.msra.mxu0 0.0
    %2206 = vmatprep.subr.mxu0 0.0
    %2207 = vmatpush1.msra.mxu0 0.0
    %2208 = vmatprep.subr.mxu0 0.0
    %2209 = vmatpush1.msra.mxu0 0.0
    %2210 = vmatprep.subr.mxu0 0.0
    %2211 = vmatpush1.msra.mxu0 0.0
    %2212 = vmatprep.mubr.f32.mxu0 0.0
    %v2213 = vand.u32 %v1641, 4294901760
    %2214 = vmatmul.mubr.f32.gmra.mrb[0].mxu0 %v2213
    %v2215 = vpop.f32.mrb[0].mxu0
    %v2216 = vadd.f32 %v2097, %v2215
    %v2217 = vpop.f32.mrb[0].mxu0
    %2218 = vdwg.mxu0
    %2219 = vmatprep.subr.mxu0 0.0
    %v2220 = vand.u32 %v1642, 4294901760
    %2221 = vmatpush1.msra.mxu0 %v2220
    %2222 = vmatprep.subr.mxu0 0.0
    %v2223 = vand.u32 %v1643, 4294901760
    %2224 = vmatpush1.msra.mxu0 %v2223
    %2225 = vmatprep.subr.mxu0 0.0
    %v2226 = vand.u32 %v1644, 4294901760
    %2227 = vmatpush1.msra.mxu0 %v2226
    %2228 = vmatprep.subr.mxu0 0.0
    %v2229 = vand.u32 %v1645, 4294901760
    %2230 = vmatpush1.msra.mxu0 %v2229
    %2231 = vmatprep.subr.mxu0 0.0
    %v2232 = vand.u32 %v1646, 4294901760
    %2233 = vmatpush1.msra.mxu0 %v2232
    %2234 = vmatprep.subr.mxu0 0.0
    %v2235 = vand.u32 %v1647, 4294901760
    %2236 = vmatpush1.msra.mxu0 %v2235
    %2237 = vmatprep.subr.mxu0 0.0
    %v2238 = vand.u32 %v1648, 4294901760
    %2239 = vmatpush1.msra.mxu0 %v2238
    %2240 = vmatprep.subr.mxu0 0.0
    %v2241 = vand.u32 %v1649, 4294901760
    %2242 = vmatpush1.msra.mxu0 %v2241
    %2243 = vmatprep.subr.mxu0 0.0
    %v2244 = vand.u32 %v1650, 4294901760
    %2245 = vmatpush1.msra.mxu0 %v2244
    %2246 = vmatprep.subr.mxu0 0.0
    %v2247 = vand.u32 %v1651, 4294901760
    %2248 = vmatpush1.msra.mxu0 %v2247
    %2249 = vmatprep.subr.mxu0 0.0
    %v2250 = vand.u32 %v1652, 4294901760
    %2251 = vmatpush1.msra.mxu0 %v2250
    %2252 = vmatprep.subr.mxu0 0.0
    %v2253 = vand.u32 %v1653, 4294901760
    %2254 = vmatpush1.msra.mxu0 %v2253
    %2255 = vmatprep.subr.mxu0 0.0
    %v2256 = vand.u32 %v1654, 4294901760
    %2257 = vmatpush1.msra.mxu0 %v2256
    %2258 = vmatprep.subr.mxu0 0.0
    %v2259 = vand.u32 %v1655, 4294901760
    %2260 = vmatpush1.msra.mxu0 %v2259
    %2261 = vmatprep.subr.mxu0 0.0
    %v2262 = vand.u32 %v1656, 4294901760
    %2263 = vmatpush1.msra.mxu0 %v2262
    %2264 = vmatprep.subr.mxu0 0.0
    %v2265 = vand.u32 %v1657, 4294901760
    %2266 = vmatpush1.msra.mxu0 %v2265
    %2267 = vmatprep.subr.mxu0 0.0
    %2268 = vmatpush1.msra.mxu0 0.0
    %2269 = vmatprep.subr.mxu0 0.0
    %2270 = vmatpush1.msra.mxu0 0.0
    %2271 = vmatprep.subr.mxu0 0.0
    %2272 = vmatpush1.msra.mxu0 0.0
    %2273 = vmatprep.subr.mxu0 0.0
    %2274 = vmatpush1.msra.mxu0 0.0
    %2275 = vmatprep.subr.mxu0 0.0
    %2276 = vmatpush1.msra.mxu0 0.0
    %2277 = vmatprep.subr.mxu0 0.0
    %2278 = vmatpush1.msra.mxu0 0.0
    %2279 = vmatprep.subr.mxu0 0.0
    %2280 = vmatpush1.msra.mxu0 0.0
    %2281 = vmatprep.subr.mxu0 0.0
    %2282 = vmatpush1.msra.mxu0 0.0
    %2283 = vmatprep.subr.mxu0 0.0
    %2284 = vmatpush1.msra.mxu0 0.0
    %2285 = vmatprep.subr.mxu0 0.0
    %2286 = vmatpush1.msra.mxu0 0.0
    %2287 = vmatprep.subr.mxu0 0.0
    %2288 = vmatpush1.msra.mxu0 0.0
    %2289 = vmatprep.subr.mxu0 0.0
    %2290 = vmatpush1.msra.mxu0 0.0
    %2291 = vmatprep.subr.mxu0 0.0
    %2292 = vmatpush1.msra.mxu0 0.0
    %2293 = vmatprep.subr.mxu0 0.0
    %2294 = vmatpush1.msra.mxu0 0.0
    %2295 = vmatprep.subr.mxu0 0.0
    %2296 = vmatpush1.msra.mxu0 0.0
    %2297 = vmatprep.subr.mxu0 0.0
    %2298 = vmatpush1.msra.mxu0 0.0
    %2299 = vmatprep.mubr.f32.mxu0 0.0
    %v2300 = vand.u32 %v1641, 4294901760
    %2301 = vmatmul.mubr.f32.gmra.mrb[0].mxu0 %v2300
    %v2302 = vpop.f32.mrb[0].mxu0
    %v2303 = vadd.f32 %v2216, %v2302
    %v2304 = vpop.f32.mrb[0].mxu0
    %2305 = vdwg.mxu0
    %2306 = vst [vmem:[%s6] sm:$0x3] %v2303
    %2307 = vst [vmem:[%s7] sm:$0x3] %v1641
    // Predicated region
    $region34: #{rnn_net_forward.1} parent=1 // pred_check
      _
    $region35: #{rnn_net_forward.1} parent=1 // pred_check_branch
      %2309 = sbr.rel (0) target = $region37
    $region36: #{rnn_net_forward.1} parent=1 // pred_region
      _
    $region37: #{rnn_net_forward.1} parent=1 // pred_fallthru
      _
    // Predicated region
    $region38: #{rnn_net_forward.1} parent=1 // pred_check
      _
    $region39: #{rnn_net_forward.1} parent=1 // pred_check_branch
      %2311 = sbr.rel (0) target = $region41
    $region40: #{rnn_net_forward.1} parent=1 // pred_region
      _
    $region41: #{rnn_net_forward.1} parent=1 // pred_fallthru
      _
    // Predicated region
    $region42: #{rnn_net_forward.1} parent=1 // pred_check
      _
    $region43: #{rnn_net_forward.1} parent=1 // pred_check_branch
      %2313 = sbr.rel (0) target = $region45
    $region44: #{rnn_net_forward.1} parent=1 // pred_region
      _
    $region45: #{rnn_net_forward.1} parent=1 // pred_fallthru
      _
    // Predicated region
    $region46: #{rnn_net_forward.1} parent=1 // pred_check
      _
    $region47: #{rnn_net_forward.1} parent=1 // pred_check_branch
      %2315 = sbr.rel (0) target = $region49
    $region48: #{rnn_net_forward.1} parent=1 // pred_region
      _
    $region49: #{rnn_net_forward.1} parent=1 // pred_fallthru
      _
    %2316 = vsyncpa [#allocation3], 1
    %2317 = vsyncpa [#allocation5], 1

</llo_original>
